<compile_context>
chip_gen: v7x
topology: tpu7x:2x2x1
jax: 0.10.0
libtpu: 0.0.40
codegen_flags: <defaults>
</compile_context>

<pallas_src>
import functools

import numpy as np
import jax
import jax.numpy as jnp
from jax.experimental import pallas as pl
from jax.experimental.pallas import tpu as pltpu

_EPS = 1e-5  # PyTorch BatchNorm2d default eps

_COMPILER_PARAMS = pltpu.CompilerParams(
    dimension_semantics=("parallel",),      # batch grid axis -> both TCs on v7x megacore
    vmem_limit_bytes=32 * 1024 * 1024,      # explicit budget, fits v5e/v6e/v7x scoped VMEM
)


# ----------------------------- Pallas kernels ------------------------------

def _fused_conv3x3_s1_kernel(*refs, H, W, mode):
    """relu(x*scale+shift) -> 3x3 conv (stride 1, pad 1), optionally fused with
    a residual add ("add") or a 1x1-projection shortcut matmul ("matmul")."""
    if mode == "none":
        x_ref, sc_ref, sh_ref, w_ref, o_ref, pad_ref = refs
        res_ref = s_ref = ssc_ref = ssh_ref = sw_ref = None
    elif mode == "add":
        x_ref, sc_ref, sh_ref, w_ref, res_ref, o_ref, pad_ref = refs
        s_ref = ssc_ref = ssh_ref = sw_ref = None
    else:  # "matmul"
        x_ref, sc_ref, sh_ref, w_ref, s_ref, ssc_ref, ssh_ref, sw_ref, o_ref, pad_ref = refs
        res_ref = None

    cin = x_ref.shape[-1]
    cout = o_ref.shape[-1]

    # --- fused BN+ReLU prologue (VPU, free under the MXU matmuls) ---
    act = jnp.maximum(x_ref[0] * sc_ref[...] + sh_ref[...], 0.0)          # (H, W, Cin)

    # --- in-kernel zero halo (replaces the XLA jnp.pad HBM round-trip) ---
    pad_ref[...] = jnp.zeros_like(pad_ref)                                # (H+2, W+2, Cin)
    pad_ref[1:H + 1, 1:W + 1, :] = act

    # --- 3x3 conv as 9 MXU matmuls; 3 column-shifted slabs reused across dy ---
    w = w_ref[...]                                                        # (3, 3, Cin, Cout)
    cols = [pad_ref[:, dx:dx + W, :] for dx in range(3)]                  # (H+2, W, Cin) each
    acc = jnp.zeros((H * W, cout), jnp.float32)
    for dy in range(3):
        for dx in range(3):
            patch = jax.lax.slice(cols[dx], (dy, 0, 0), (dy + H, W, cin))
            acc = acc + jnp.dot(patch.reshape(H * W, cin), w[dy, dx],
                                preferred_element_type=jnp.float32)

    # --- fused 1x1 projection shortcut: 10th matmul on the same accumulator ---
    if mode == "matmul":
        cs = s_ref.shape[-1]
        s_act = jnp.maximum(s_ref[0] * ssc_ref[...] + ssh_ref[...], 0.0)  # (H, W, Cs)
        acc = acc + jnp.dot(s_act.reshape(H * W, cs), sw_ref[...],
                            preferred_element_type=jnp.float32)

    out = acc.reshape(H, W, cout)
    if mode == "add":
        out = out + res_ref[0]                                            # identity shortcut
    o_ref[0] = out.astype(o_ref.dtype)


def _fused_conv3x3_s2_kernel(x2_ref, sc_ref, sh_ref, w12_ref, w0_ref,
                             u_ref, acts_ref, pad_ref, *, H, W, Cin):
    """Stride-2, pad-1 3x3 conv with fused BN+ReLU, computed directly on the
    strided output grid (no 4x over-compute, no full-res output write).

    The wrapper folds the column parity into the lane dim (free reshape):
      x2[h, j, :Cin] = x[h, 2j], x2[h, j, Cin:] = x[h, 2j+1].
    Row parity is handled by the scratch layout; taps reduce to 6 MXU matmuls
    with K = 2*Cin.  Also emits act[::2, ::2] for the 1x1 projection shortcut.
    """
    Ho, Wo = H // 2, W // 2
    C2 = 2 * Cin
    cm = u_ref.shape[-1]

    act2 = jnp.maximum(x2_ref[0] * sc_ref[...] + sh_ref[...], 0.0)        # (H, Wo, 2Cin)
    act4 = act2.reshape(Ho, 2, Wo, C2)                                    # split row parity (free)
    even = act4[:, 0]                                                     # act rows 2q
    odd = act4[:, 1]                                                      # act rows 2q+1

    # shortcut activation = relu(bn(x))[::2, ::2, :]  (even rows, even columns)
    acts_ref[0] = even[:, :, :Cin].astype(acts_ref.dtype)

    # padded, parity-separated activation:
    #   pad[i, 1, j] holds act row 2i, pad[i, 0, j] holds act row 2i-1 (column
    #   pair j-1); pad[0, 0] (row -1) and column j=0 (left halo) stay zero.
    pad_ref[...] = jnp.zeros_like(pad_ref)                                # (Ho+1, 2, Wo+1, 2Cin)
    pad_ref[0:Ho, 1, 1:Wo + 1, :] = even
    pad_ref[1:Ho + 1, 0, 1:Wo + 1, :] = odd

    w12 = w12_ref[...]                                                    # (3, 2Cin, Cm): dx=1,2
    w0 = w0_ref[...]                                                      # (3, 2Cin, Cm): dx=0
    acc = jnp.zeros((Ho * Wo, cm), jnp.float32)
    # rows of the padded buffer holding act rows (2*oy + dy - 1), per dy:
    row_map = ((0, 0), (0, 1), (1, 0))                                    # (row offset, parity)
    for dy in range(3):
        r0, par = row_map[dy]
        left = pad_ref[r0:r0 + Ho, par, 0:Wo, :]        # columns 2*ox-1 (odd half)  -> dx=0
        right = pad_ref[r0:r0 + Ho, par, 1:Wo + 1, :]   # columns 2*ox, 2*ox+1       -> dx=1,2
        acc = acc + jnp.dot(left.reshape(Ho * Wo, C2), w0[dy],
                            preferred_element_type=jnp.float32)
        acc = acc + jnp.dot(right.reshape(Ho * Wo, C2), w12[dy],
                            preferred_element_type=jnp.float32)
    u_ref[0] = acc.reshape(Ho, Wo, cm).astype(u_ref.dtype)


# ------------------------------ Pallas wrappers -----------------------------

def _fold_bn(gamma, beta, mean, var):
    scale = gamma / jnp.sqrt(var + _EPS)
    shift = beta - mean * scale
    return scale, shift


def fused_conv3x3(x, scale, shift, w, residual=None, shortcut=None):
    """y = conv3x3(relu(x*scale+shift), w, stride=1, pad=1) [+ residual]
                                                            [+ relu(s*ssc+ssh) @ sw]."""
    n, h, wd, c = x.shape
    cout = w.shape[-1]
    if residual is not None:
        mode = "add"
    elif shortcut is not None:
        mode = "matmul"
    else:
        mode = "none"

    kernel = functools.partial(_fused_conv3x3_s1_kernel, H=h, W=wd, mode=mode)
    in_specs = [
        pl.BlockSpec((1, h, wd, c), lambda b: (b, 0, 0, 0)),
        pl.BlockSpec((1, 1, c), lambda b: (0, 0, 0)),
        pl.BlockSpec((1, 1, c), lambda b: (0, 0, 0)),
        pl.BlockSpec((3, 3, c, cout), lambda b: (0, 0, 0, 0)),
    ]
    args = [x, scale.reshape(1, 1, c), shift.reshape(1, 1, c), w]
    if mode == "add":
        in_specs.append(pl.BlockSpec((1, h, wd, cout), lambda b: (b, 0, 0, 0)))
        args.append(residual)
    elif mode == "matmul":
        s_in, s_scale, s_shift, s_w = shortcut
        cs = s_in.shape[-1]
        in_specs += [
            pl.BlockSpec((1, h, wd, cs), lambda b: (b, 0, 0, 0)),
            pl.BlockSpec((1, 1, cs), lambda b: (0, 0, 0)),
            pl.BlockSpec((1, 1, cs), lambda b: (0, 0, 0)),
            pl.BlockSpec((cs, cout), lambda b: (0, 0)),
        ]
        args += [s_in, s_scale.reshape(1, 1, cs), s_shift.reshape(1, 1, cs), s_w]

    return pl.pallas_call(
        kernel,
        out_shape=jax.ShapeDtypeStruct((n, h, wd, cout), x.dtype),
        grid=(n,),
        in_specs=in_specs,
        out_specs=pl.BlockSpec((1, h, wd, cout), lambda b: (b, 0, 0, 0)),
        scratch_shapes=[pltpu.VMEM((h + 2, wd + 2, c), jnp.float32)],
        compiler_params=_COMPILER_PARAMS,
    )(*args)


def fused_conv3x3_stride2(x, scale, shift, w):
    """Returns (u, act_s) with u = conv3x3(relu(x*scale+shift), w, stride=2, pad=1)
    and act_s = relu(x*scale+shift)[:, ::2, ::2, :] (for the 1x1 shortcut)."""
    n, h, wd, c = x.shape
    assert h % 2 == 0 and wd % 2 == 0
    cm = w.shape[-1]
    ho, wo = h // 2, wd // 2
    c2 = 2 * c

    x2 = x.reshape(n, h, wo, c2)                            # contiguous -> free reshape
    scale2 = jnp.concatenate([scale, scale]).reshape(1, 1, c2)
    shift2 = jnp.concatenate([shift, shift]).reshape(1, 1, c2)
    w12 = jnp.concatenate([w[:, 1], w[:, 2]], axis=1)       # (3, 2c, cm): taps dx=1,2
    w0 = jnp.concatenate([jnp.zeros_like(w[:, 0]), w[:, 0]], axis=1)  # (3, 2c, cm): tap dx=0

    kernel = functools.partial(_fused_conv3x3_s2_kernel, H=h, W=wd, Cin=c)
    u, act_s = pl.pallas_call(
        kernel,
        out_shape=(jax.ShapeDtypeStruct((n, ho, wo, cm), x.dtype),
                   jax.ShapeDtypeStruct((n, ho, wo, c), x.dtype)),
        grid=(n,),
        in_specs=[
            pl.BlockSpec((1, h, wo, c2), lambda b: (b, 0, 0, 0)),
            pl.BlockSpec((1, 1, c2), lambda b: (0, 0, 0)),
            pl.BlockSpec((1, 1, c2), lambda b: (0, 0, 0)),
            pl.BlockSpec((3, c2, cm), lambda b: (0, 0, 0)),
            pl.BlockSpec((3, c2, cm), lambda b: (0, 0, 0)),
        ],
        out_specs=(pl.BlockSpec((1, ho, wo, cm), lambda b: (b, 0, 0, 0)),
                   pl.BlockSpec((1, ho, wo, c), lambda b: (b, 0, 0, 0))),
        scratch_shapes=[pltpu.VMEM((ho + 1, 2, wo + 1, c2), jnp.float32)],
        compiler_params=_COMPILER_PARAMS,
    )(x2, scale2, shift2, w12, w0)
    return u, act_s


# --------------------------- NetworkBlock forward ---------------------------

def basic_block_forward(x, p, stride):
    in_planes = x.shape[-1]
    out_planes = p["conv1_w"].shape[-1]
    equal_in_out = in_planes == out_planes          # same test as the PyTorch block
    h, wsp = x.shape[1], x.shape[2]

    scale1, shift1 = _fold_bn(p["bn1_gamma"], p["bn1_beta"], p["bn1_mean"], p["bn1_var"])
    scale2, shift2 = _fold_bn(p["bn2_gamma"], p["bn2_beta"], p["bn2_mean"], p["bn2_var"])
    # TODO(synk): F.dropout (dropRate > 0, training=True) not implemented; dropRate=0.0 path.

    if stride == 1:
        u = fused_conv3x3(x, scale1, shift1, p["conv1_w"])                      # kernel 1
        if equal_in_out:
            return fused_conv3x3(u, scale2, shift2, p["conv2_w"], residual=x)   # kernel 2
        # 1x1 projection of relu(bn1(x)) is recomputed in kernel 2's prologue.
        return fused_conv3x3(u, scale2, shift2, p["conv2_w"],
                             shortcut=(x, scale1, shift1, p["short_w"]))

    if stride == 2 and h % 2 == 0 and wsp % 2 == 0 and not equal_in_out:
        u, act_s = fused_conv3x3_stride2(x, scale1, shift1, p["conv1_w"])       # kernel 1
        ones = jnp.ones((in_planes,), x.dtype)
        zeros = jnp.zeros((in_planes,), x.dtype)
        # act_s is already BN+ReLU'd, so its prologue in kernel 2 is an identity.
        return fused_conv3x3(u, scale2, shift2, p["conv2_w"],
                             shortcut=(act_s, ones, zeros, p["short_w"]))       # kernel 2

    # Generic fallback (odd spatial dims / stride > 2): stride-1 conv + decimate.
    u = fused_conv3x3(x, scale1, shift1, p["conv1_w"])[:, ::stride, ::stride, :]
    xs = x[:, ::stride, ::stride, :]
    if equal_in_out:
        return fused_conv3x3(u, scale2, shift2, p["conv2_w"], residual=xs)
    return fused_conv3x3(u, scale2, shift2, p["conv2_w"],
                         shortcut=(xs, scale1, shift1, p["short_w"]))


def network_block_forward(x_nchw, params, stride):
    # x_nchw: (N, C, H, W) exactly like the PyTorch module; returns NCHW.
    x = jnp.transpose(x_nchw, (0, 2, 3, 1))          # NCHW -> NHWC once per block
    for i, p in enumerate(params):
        x = basic_block_forward(x, p, stride if i == 0 else 1)
    return jnp.transpose(x, (0, 3, 1, 2))            # back to NCHW


# ------------------------- deterministic parameters -------------------------

def init_params(key, nb_layers, in_planes, out_planes):
    params = []
    for i in range(nb_layers):
        ip = in_planes if i == 0 else out_planes
        ks = jax.random.split(jax.random.fold_in(key, i), 12)
        p = {
            "bn1_gamma": 1.0 + 0.1 * jax.random.normal(ks[0], (ip,), jnp.float32),
            "bn1_beta": 0.1 * jax.random.normal(ks[1], (ip,), jnp.float32),
            "bn1_mean": 0.1 * jax.random.normal(ks[2], (ip,), jnp.float32),
            "bn1_var": 1.0 + 0.1 * jnp.abs(jax.random.normal(ks[3], (ip,), jnp.float32)),
            "conv1_w": jax.random.normal(ks[4], (3, 3, ip, out_planes), jnp.float32)
                       * (2.0 / (9 * out_planes)) ** 0.5,
            "bn2_gamma": 1.0 + 0.1 * jax.random.normal(ks[5], (out_planes,), jnp.float32),
            "bn2_beta": 0.1 * jax.random.normal(ks[6], (out_planes,), jnp.float32),
            "bn2_mean": 0.1 * jax.random.normal(ks[7], (out_planes,), jnp.float32),
            "bn2_var": 1.0 + 0.1 * jnp.abs(jax.random.normal(ks[8], (out_planes,), jnp.float32)),
            "conv2_w": jax.random.normal(ks[9], (3, 3, out_planes, out_planes), jnp.float32)
                       * (2.0 / (9 * out_planes)) ** 0.5,
        }
        if ip != out_planes:
            p["short_w"] = (jax.random.normal(ks[10], (ip, out_planes), jnp.float32)
                            * (2.0 / out_planes) ** 0.5)
        params.append(p)
    return params


# ------------------------------ pure-JAX reference ---------------------------

def _ref_bn_relu(x, g, b, m, v):
    return jnp.maximum((x - m) / jnp.sqrt(v + _EPS) * g + b, 0.0)


def _ref_conv(x, w, stride, padding):
    return jax.lax.conv_general_dilated(
        x, w, (stride, stride), padding,
        dimension_numbers=("NHWC", "HWIO", "NHWC"))


def reference_forward(x_nchw, params, stride):
    x = jnp.transpose(x_nchw, (0, 2, 3, 1))
    for i, p in enumerate(params):
        st = stride if i == 0 else 1
        ip, op = x.shape[-1], p["conv1_w"].shape[-1]
        equal = ip == op
        act = _ref_bn_relu(x, p["bn1_gamma"], p["bn1_beta"], p["bn1_mean"], p["bn1_var"])
        xx = x if equal else act
        out = _ref_conv(act if equal else xx, p["conv1_w"], st, [(1, 1), (1, 1)])
        out = _ref_bn_relu(out, p["bn2_gamma"], p["bn2_beta"], p["bn2_mean"], p["bn2_var"])
        out = _ref_conv(out, p["conv2_w"], 1, [(1, 1), (1, 1)])
        sc = xx if equal else _ref_conv(xx, p["short_w"].reshape(1, 1, ip, op),
                                        st, [(0, 0), (0, 0)])
        x = sc + out
    return jnp.transpose(x, (0, 3, 1, 2))


# ----------------------------------- main ------------------------------------

if __name__ == "__main__":
    key = jax.random.PRNGKey(0)
    kx, kp, kp2 = jax.random.split(key, 3)

    in_planes, out_planes = 4, 8
    x = jax.random.normal(kx, (2, in_planes, 16, 16), jnp.float32)   # NCHW, like PyTorch

    # Config 1: strided channel-changing block (folded stride-2 kernel + fused
    # 1x1-projection shortcut) followed by an identity block (fused residual).
    params = init_params(kp, 2, in_planes, out_planes)
    y = jax.block_until_ready(network_block_forward(x, params, 2))
    y_ref = jax.block_until_ready(reference_forward(x, params, 2))
    assert y.shape == (2, out_planes, 8, 8)
    np.testing.assert_allclose(np.asarray(y), np.asarray(y_ref), atol=1e-4, rtol=1e-4)

    # Config 2: stride-1 channel-changing block (shortcut BN1+ReLU recomputed
    # inside the second conv kernel's prologue).
    params2 = init_params(kp2, 1, in_planes, out_planes)
    y2 = jax.block_until_ready(network_block_forward(x, params2, 1))
    y2_ref = jax.block_until_ready(reference_forward(x, params2, 1))
    assert y2.shape == (2, out_planes, 16, 16)
    np.testing.assert_allclose(np.asarray(y2), np.asarray(y2_ref), atol=1e-4, rtol=1e-4)

    print("KERNEL_OK")
</pallas_src>

<mosaic_0001>
module attributes {stable_mosaic.version = 11 : i64} {
  func.func @_fused_conv3x3_s2_kernel(%arg0: i32, %arg1: memref<1x16x8x8xf32, #tpu.memory_space<vmem>>, %arg2: memref<1x1x8xf32, #tpu.memory_space<vmem>>, %arg3: memref<1x1x8xf32, #tpu.memory_space<vmem>>, %arg4: memref<3x8x8xf32, #tpu.memory_space<vmem>>, %arg5: memref<3x8x8xf32, #tpu.memory_space<vmem>>, %arg6: memref<1x8x8x8xf32, #tpu.memory_space<vmem>>, %arg7: memref<1x8x8x4xf32, #tpu.memory_space<vmem>>, %arg8: memref<9x2x9x8xf32, #tpu.memory_space<vmem>>) attributes {dimension_semantics = [#tpu.dimension_semantics<parallel>], iteration_bounds = array<i64: 2>, scalar_prefetch = 0 : i64, scratch_operands = 1 : i64, tpu.core_type = #tpu.core_type<tc>, window_params = [{transform_indices = @transform_0, window_bounds = array<i64: 1, 16, 8, 8>}, {pipeline_mode = #tpu.pipeline_mode<synchronous>, transform_indices = @transform_1, window_bounds = array<i64: 1, 1, 8>}, {pipeline_mode = #tpu.pipeline_mode<synchronous>, transform_indices = @transform_2, window_bounds = array<i64: 1, 1, 8>}, {pipeline_mode = #tpu.pipeline_mode<synchronous>, transform_indices = @transform_3, window_bounds = array<i64: 3, 8, 8>}, {pipeline_mode = #tpu.pipeline_mode<synchronous>, transform_indices = @transform_4, window_bounds = array<i64: 3, 8, 8>}, {transform_indices = @transform_5, window_bounds = array<i64: 1, 8, 8, 8>}, {transform_indices = @transform_6, window_bounds = array<i64: 1, 8, 8, 4>}]} {
    %c0 = arith.constant 0 : index
    %c0_0 = arith.constant 0 : index
    %c0_1 = arith.constant 0 : index
    %c0_2 = arith.constant 0 : index
    %0 = vector.load %arg1[%c0, %c0_0, %c0_1, %c0_2] : memref<1x16x8x8xf32, #tpu.memory_space<vmem>>, vector<1x16x8x8xf32>
    %1 = vector.shape_cast %0 : vector<1x16x8x8xf32> to vector<16x8x8xf32>
    %c0_3 = arith.constant 0 : index
    %c0_4 = arith.constant 0 : index
    %c0_5 = arith.constant 0 : index
    %2 = vector.load %arg2[%c0_3, %c0_4, %c0_5] : memref<1x1x8xf32, #tpu.memory_space<vmem>>, vector<1x1x8xf32>
    %3 = vector.broadcast %2 : vector<1x1x8xf32> to vector<16x8x8xf32>
    %4 = arith.mulf %1, %3 : vector<16x8x8xf32>
    %c0_6 = arith.constant 0 : index
    %c0_7 = arith.constant 0 : index
    %c0_8 = arith.constant 0 : index
    %5 = vector.load %arg3[%c0_6, %c0_7, %c0_8] : memref<1x1x8xf32, #tpu.memory_space<vmem>>, vector<1x1x8xf32>
    %6 = vector.broadcast %5 : vector<1x1x8xf32> to vector<16x8x8xf32>
    %7 = arith.addf %4, %6 : vector<16x8x8xf32>
    %cst = arith.constant 0.000000e+00 : f32
    %8 = vector.broadcast %cst : f32 to vector<16x8x8xf32>
    %9 = arith.maximumf %7, %8 : vector<16x8x8xf32>
    %10 = vector.shape_cast %9 : vector<16x8x8xf32> to vector<8x2x8x8xf32>
    %11 = vector.extract_strided_slice %10 {offsets = [0, 0, 0, 0], sizes = [8, 1, 8, 8], strides = [1, 1, 1, 1]} : vector<8x2x8x8xf32> to vector<8x1x8x8xf32>
    %12 = vector.shape_cast %11 : vector<8x1x8x8xf32> to vector<8x8x8xf32>
    %13 = vector.extract_strided_slice %10 {offsets = [0, 1, 0, 0], sizes = [8, 1, 8, 8], strides = [1, 1, 1, 1]} : vector<8x2x8x8xf32> to vector<8x1x8x8xf32>
    %14 = vector.shape_cast %13 : vector<8x1x8x8xf32> to vector<8x8x8xf32>
    %15 = vector.extract_strided_slice %12 {offsets = [0, 0, 0], sizes = [8, 8, 4], strides = [1, 1, 1]} : vector<8x8x8xf32> to vector<8x8x4xf32>
    %c0_9 = arith.constant 0 : index
    %c0_10 = arith.constant 0 : index
    %c0_11 = arith.constant 0 : index
    %c0_12 = arith.constant 0 : index
    %16 = vector.load %arg7[%c0_9, %c0_10, %c0_11, %c0_12] : memref<1x8x8x4xf32, #tpu.memory_space<vmem>>, vector<1x8x8x4xf32>
    %17 = vector.shape_cast %16 : vector<1x8x8x4xf32> to vector<8x8x4xf32>
    %18 = vector.shape_cast %15 : vector<8x8x4xf32> to vector<1x8x8x4xf32>
    tpu.vector_store %arg7[%c0_9, %c0_10, %c0_11, %c0_12], %18 {strides = array<i32>} : memref<1x8x8x4xf32, #tpu.memory_space<vmem>>, vector<1x8x8x4xf32>,
    %cst_13 = arith.constant 0.000000e+00 : f32
    %19 = vector.broadcast %cst_13 : f32 to vector<9x2x9x8xf32>
    %c0_14 = arith.constant 0 : index
    %c0_15 = arith.constant 0 : index
    %c0_16 = arith.constant 0 : index
    %c0_17 = arith.constant 0 : index
    %20 = vector.load %arg8[%c0_14, %c0_15, %c0_16, %c0_17] : memref<9x2x9x8xf32, #tpu.memory_space<vmem>>, vector<9x2x9x8xf32>
    tpu.vector_store %arg8[%c0_14, %c0_15, %c0_16, %c0_17], %19 {strides = array<i32>} : memref<9x2x9x8xf32, #tpu.memory_space<vmem>>, vector<9x2x9x8xf32>,
    %c0_18 = arith.constant 0 : index
    %c1 = arith.constant 1 : index
    %c1_19 = arith.constant 1 : index
    %c0_20 = arith.constant 0 : index
    %21 = vector.load %arg8[%c0_18, %c1, %c1_19, %c0_20] : memref<9x2x9x8xf32, #tpu.memory_space<vmem>>, vector<8x1x8x8xf32>
    %22 = vector.shape_cast %21 : vector<8x1x8x8xf32> to vector<8x8x8xf32>
    %23 = vector.shape_cast %12 : vector<8x8x8xf32> to vector<8x1x8x8xf32>
    tpu.vector_store %arg8[%c0_18, %c1, %c1_19, %c0_20], %23 {strides = array<i32>} : memref<9x2x9x8xf32, #tpu.memory_space<vmem>>, vector<8x1x8x8xf32>,
    %c1_21 = arith.constant 1 : index
    %c0_22 = arith.constant 0 : index
    %c1_23 = arith.constant 1 : index
    %c0_24 = arith.constant 0 : index
    %24 = vector.load %arg8[%c1_21, %c0_22, %c1_23, %c0_24] : memref<9x2x9x8xf32, #tpu.memory_space<vmem>>, vector<8x1x8x8xf32>
    %25 = vector.shape_cast %24 : vector<8x1x8x8xf32> to vector<8x8x8xf32>
    %26 = vector.shape_cast %14 : vector<8x8x8xf32> to vector<8x1x8x8xf32>
    tpu.vector_store %arg8[%c1_21, %c0_22, %c1_23, %c0_24], %26 {strides = array<i32>} : memref<9x2x9x8xf32, #tpu.memory_space<vmem>>, vector<8x1x8x8xf32>,
    %c0_25 = arith.constant 0 : index
    %c0_26 = arith.constant 0 : index
    %c0_27 = arith.constant 0 : index
    %27 = vector.load %arg4[%c0_25, %c0_26, %c0_27] : memref<3x8x8xf32, #tpu.memory_space<vmem>>, vector<3x8x8xf32>
    %c0_28 = arith.constant 0 : index
    %c0_29 = arith.constant 0 : index
    %c0_30 = arith.constant 0 : index
    %28 = vector.load %arg5[%c0_28, %c0_29, %c0_30] : memref<3x8x8xf32, #tpu.memory_space<vmem>>, vector<3x8x8xf32>
    %cst_31 = arith.constant 0.000000e+00 : f32
    %29 = vector.broadcast %cst_31 : f32 to vector<64x8xf32>
    %c0_32 = arith.constant 0 : index
    %c0_33 = arith.constant 0 : index
    %c0_34 = arith.constant 0 : index
    %c0_35 = arith.constant 0 : index
    %30 = vector.load %arg8[%c0_32, %c0_33, %c0_34, %c0_35] : memref<9x2x9x8xf32, #tpu.memory_space<vmem>>, vector<8x1x8x8xf32>
    %31 = vector.shape_cast %30 : vector<8x1x8x8xf32> to vector<8x8x8xf32>
    %c0_36 = arith.constant 0 : index
    %c0_37 = arith.constant 0 : index
    %c1_38 = arith.constant 1 : index
    %c0_39 = arith.constant 0 : index
    %32 = vector.load %arg8[%c0_36, %c0_37, %c1_38, %c0_39] : memref<9x2x9x8xf32, #tpu.memory_space<vmem>>, vector<8x1x8x8xf32>
    %33 = vector.shape_cast %32 : vector<8x1x8x8xf32> to vector<8x8x8xf32>
    %34 = vector.shape_cast %31 : vector<8x8x8xf32> to vector<64x8xf32>
    %35 = vector.extract_strided_slice %28 {offsets = [0, 0, 0], sizes = [1, 8, 8], strides = [1, 1, 1]} : vector<3x8x8xf32> to vector<1x8x8xf32>
    %36 = vector.shape_cast %35 : vector<1x8x8xf32> to vector<8x8xf32>
    %cst_40 = arith.constant dense<0.000000e+00> : vector<64x8xf32>
    %37 = tpu.matmul %34, %36, %cst_40 {dimension_numbers = #tpu.dot_dimension_numbers<[1], [0], [0], [1], [0, 0, 1, 1], [], []>} : vector<64x8xf32>, vector<8x8xf32>, vector<64x8xf32> -> vector<64x8xf32>
    %38 = arith.addf %29, %37 : vector<64x8xf32>
    %39 = vector.shape_cast %33 : vector<8x8x8xf32> to vector<64x8xf32>
    %40 = vector.extract_strided_slice %27 {offsets = [0, 0, 0], sizes = [1, 8, 8], strides = [1, 1, 1]} : vector<3x8x8xf32> to vector<1x8x8xf32>
    %41 = vector.shape_cast %40 : vector<1x8x8xf32> to vector<8x8xf32>
    %cst_41 = arith.constant dense<0.000000e+00> : vector<64x8xf32>
    %42 = tpu.matmul %39, %41, %cst_41 {dimension_numbers = #tpu.dot_dimension_numbers<[1], [0], [0], [1], [0, 0, 1, 1], [], []>} : vector<64x8xf32>, vector<8x8xf32>, vector<64x8xf32> -> vector<64x8xf32>
    %43 = arith.addf %38, %42 : vector<64x8xf32>
    %c0_42 = arith.constant 0 : index
    %c1_43 = arith.constant 1 : index
    %c0_44 = arith.constant 0 : index
    %c0_45 = arith.constant 0 : index
    %44 = vector.load %arg8[%c0_42, %c1_43, %c0_44, %c0_45] : memref<9x2x9x8xf32, #tpu.memory_space<vmem>>, vector<8x1x8x8xf32>
    %45 = vector.shape_cast %44 : vector<8x1x8x8xf32> to vector<8x8x8xf32>
    %c0_46 = arith.constant 0 : index
    %c1_47 = arith.constant 1 : index
    %c1_48 = arith.constant 1 : index
    %c0_49 = arith.constant 0 : index
    %46 = vector.load %arg8[%c0_46, %c1_47, %c1_48, %c0_49] : memref<9x2x9x8xf32, #tpu.memory_space<vmem>>, vector<8x1x8x8xf32>
    %47 = vector.shape_cast %46 : vector<8x1x8x8xf32> to vector<8x8x8xf32>
    %48 = vector.shape_cast %45 : vector<8x8x8xf32> to vector<64x8xf32>
    %49 = vector.extract_strided_slice %28 {offsets = [1, 0, 0], sizes = [1, 8, 8], strides = [1, 1, 1]} : vector<3x8x8xf32> to vector<1x8x8xf32>
    %50 = vector.shape_cast %49 : vector<1x8x8xf32> to vector<8x8xf32>
    %cst_50 = arith.constant dense<0.000000e+00> : vector<64x8xf32>
    %51 = tpu.matmul %48, %50, %cst_50 {dimension_numbers = #tpu.dot_dimension_numbers<[1], [0], [0], [1], [0, 0, 1, 1], [], []>} : vector<64x8xf32>, vector<8x8xf32>, vector<64x8xf32> -> vector<64x8xf32>
    %52 = arith.addf %43, %51 : vector<64x8xf32>
    %53 = vector.shape_cast %47 : vector<8x8x8xf32> to vector<64x8xf32>
    %54 = vector.extract_strided_slice %27 {offsets = [1, 0, 0], sizes = [1, 8, 8], strides = [1, 1, 1]} : vector<3x8x8xf32> to vector<1x8x8xf32>
    %55 = vector.shape_cast %54 : vector<1x8x8xf32> to vector<8x8xf32>
    %cst_51 = arith.constant dense<0.000000e+00> : vector<64x8xf32>
    %56 = tpu.matmul %53, %55, %cst_51 {dimension_numbers = #tpu.dot_dimension_numbers<[1], [0], [0], [1], [0, 0, 1, 1], [], []>} : vector<64x8xf32>, vector<8x8xf32>, vector<64x8xf32> -> vector<64x8xf32>
    %57 = arith.addf %52, %56 : vector<64x8xf32>
    %c1_52 = arith.constant 1 : index
    %c0_53 = arith.constant 0 : index
    %c0_54 = arith.constant 0 : index
    %c0_55 = arith.constant 0 : index
    %58 = vector.load %arg8[%c1_52, %c0_53, %c0_54, %c0_55] : memref<9x2x9x8xf32, #tpu.memory_space<vmem>>, vector<8x1x8x8xf32>
    %59 = vector.shape_cast %58 : vector<8x1x8x8xf32> to vector<8x8x8xf32>
    %c1_56 = arith.constant 1 : index
    %c0_57 = arith.constant 0 : index
    %c1_58 = arith.constant 1 : index
    %c0_59 = arith.constant 0 : index
    %60 = vector.load %arg8[%c1_56, %c0_57, %c1_58, %c0_59] : memref<9x2x9x8xf32, #tpu.memory_space<vmem>>, vector<8x1x8x8xf32>
    %61 = vector.shape_cast %60 : vector<8x1x8x8xf32> to vector<8x8x8xf32>
    %62 = vector.shape_cast %59 : vector<8x8x8xf32> to vector<64x8xf32>
    %63 = vector.extract_strided_slice %28 {offsets = [2, 0, 0], sizes = [1, 8, 8], strides = [1, 1, 1]} : vector<3x8x8xf32> to vector<1x8x8xf32>
    %64 = vector.shape_cast %63 : vector<1x8x8xf32> to vector<8x8xf32>
    %cst_60 = arith.constant dense<0.000000e+00> : vector<64x8xf32>
    %65 = tpu.matmul %62, %64, %cst_60 {dimension_numbers = #tpu.dot_dimension_numbers<[1], [0], [0], [1], [0, 0, 1, 1], [], []>} : vector<64x8xf32>, vector<8x8xf32>, vector<64x8xf32> -> vector<64x8xf32>
    %66 = arith.addf %57, %65 : vector<64x8xf32>
    %67 = vector.shape_cast %61 : vector<8x8x8xf32> to vector<64x8xf32>
    %68 = vector.extract_strided_slice %27 {offsets = [2, 0, 0], sizes = [1, 8, 8], strides = [1, 1, 1]} : vector<3x8x8xf32> to vector<1x8x8xf32>
    %69 = vector.shape_cast %68 : vector<1x8x8xf32> to vector<8x8xf32>
    %cst_61 = arith.constant dense<0.000000e+00> : vector<64x8xf32>
    %70 = tpu.matmul %67, %69, %cst_61 {dimension_numbers = #tpu.dot_dimension_numbers<[1], [0], [0], [1], [0, 0, 1, 1], [], []>} : vector<64x8xf32>, vector<8x8xf32>, vector<64x8xf32> -> vector<64x8xf32>
    %71 = arith.addf %66, %70 : vector<64x8xf32>
    %72 = vector.shape_cast %71 : vector<64x8xf32> to vector<8x8x8xf32>
    %c0_62 = arith.constant 0 : index
    %c0_63 = arith.constant 0 : index
    %c0_64 = arith.constant 0 : index
    %c0_65 = arith.constant 0 : index
    %73 = vector.load %arg6[%c0_62, %c0_63, %c0_64, %c0_65] : memref<1x8x8x8xf32, #tpu.memory_space<vmem>>, vector<1x8x8x8xf32>
    %74 = vector.shape_cast %73 : vector<1x8x8x8xf32> to vector<8x8x8xf32>
    %75 = vector.shape_cast %72 : vector<8x8x8xf32> to vector<1x8x8x8xf32>
    tpu.vector_store %arg6[%c0_62, %c0_63, %c0_64, %c0_65], %75 {strides = array<i32>} : memref<1x8x8x8xf32, #tpu.memory_space<vmem>>, vector<1x8x8x8xf32>,
    return
  }
  func.func @transform_0(%arg0: i32) -> (i32, i32, i32, i32) {
    %c0_i32 = arith.constant 0 : i32
    %c0_i32_0 = arith.constant 0 : i32
    %c0_i32_1 = arith.constant 0 : i32
    %c0_i32_2 = arith.constant 0 : i32
    return %arg0, %c0_i32, %c0_i32_0, %c0_i32_1 : i32, i32, i32, i32
  }
  func.func @transform_1(%arg0: i32) -> (i32, i32, i32) {
    %c0_i32 = arith.constant 0 : i32
    %c0_i32_0 = arith.constant 0 : i32
    %c0_i32_1 = arith.constant 0 : i32
    %c0_i32_2 = arith.constant 0 : i32
    return %c0_i32, %c0_i32_0, %c0_i32_1 : i32, i32, i32
  }
  func.func @transform_2(%arg0: i32) -> (i32, i32, i32) {
    %c0_i32 = arith.constant 0 : i32
    %c0_i32_0 = arith.constant 0 : i32
    %c0_i32_1 = arith.constant 0 : i32
    %c0_i32_2 = arith.constant 0 : i32
    return %c0_i32, %c0_i32_0, %c0_i32_1 : i32, i32, i32
  }
  func.func @transform_3(%arg0: i32) -> (i32, i32, i32) {
    %c0_i32 = arith.constant 0 : i32
    %c0_i32_0 = arith.constant 0 : i32
    %c0_i32_1 = arith.constant 0 : i32
    %c0_i32_2 = arith.constant 0 : i32
    return %c0_i32, %c0_i32_0, %c0_i32_1 : i32, i32, i32
  }
  func.func @transform_4(%arg0: i32) -> (i32, i32, i32) {
    %c0_i32 = arith.constant 0 : i32
    %c0_i32_0 = arith.constant 0 : i32
    %c0_i32_1 = arith.constant 0 : i32
    %c0_i32_2 = arith.constant 0 : i32
    return %c0_i32, %c0_i32_0, %c0_i32_1 : i32, i32, i32
  }
  func.func @transform_5(%arg0: i32) -> (i32, i32, i32, i32) {
    %c0_i32 = arith.constant 0 : i32
    %c0_i32_0 = arith.constant 0 : i32
    %c0_i32_1 = arith.constant 0 : i32
    %c0_i32_2 = arith.constant 0 : i32
    return %arg0, %c0_i32, %c0_i32_0, %c0_i32_1 : i32, i32, i32, i32
  }
  func.func @transform_6(%arg0: i32) -> (i32, i32, i32, i32) {
    %c0_i32 = arith.constant 0 : i32
    %c0_i32_0 = arith.constant 0 : i32
    %c0_i32_1 = arith.constant 0 : i32
    %c0_i32_2 = arith.constant 0 : i32
    return %arg0, %c0_i32, %c0_i32_0, %c0_i32_1 : i32, i32, i32, i32
  }
}

</mosaic_0001>

<llo_original>
// kernel: tpu_custom_call.1
$region0: #{tpu_custom_call.1}
  #allocation0 [shape = 'u32[]', space=smem, size = 0x4, offset = 0x4, fixed_abs, tag = 'smem constant byte address 0x4 - core index']
  #allocation1 [shape = 'u32[144,128]{1,0:T(1,128)}', space=vmem, size = 0x12000, scoped, tag = 'internal scratch']
  #allocation2 [shape = 'f32[9,2,9,8]{3,2,1,0:T(8,128)}', space=vmem, size = 0x24000, scoped, tag = 'scratch operand']
  %s0 = inlined_call_operand.vmem [shape: f32[2,16,8,8], index: 0, kind: input, shape index: {}]
  %s1 = inlined_call_operand.vmem [shape: f32[1,1,8], index: 1, kind: input, shape index: {}]
  %s2 = inlined_call_operand.vmem [shape: f32[1,1,8], index: 2, kind: input, shape index: {}]
  %s3 = inlined_call_operand.vmem [shape: f32[3,8,8], index: 3, kind: input, shape index: {}]
  %s4 = inlined_call_operand.vmem [shape: f32[3,8,8], index: 4, kind: input, shape index: {}]
  %s5 = inlined_call_operand.hbm [shape: f32[2,8,8,8], index: 5, kind: output, shape index: {0}]
  %s6 = inlined_call_operand.vmem [shape: f32[2,8,8,4], index: 6, kind: output, shape index: {1}]
  %7 = xla_tuple %s5, %s6
  %s8 = sld [smem:[#allocation0]]
  $region61: #{tpu_custom_call.1} parent=0
    _
  %s10 = ssub.s32 1, %s8
  %s11 = scalar_select 0, %s10, %s8
  $region1: #{tpu_custom_call.1} parent=0
    #allocation3 [shape = 'u8[65536]{0}', space=vmem, size = 0x10000, scoped, tag = 'output window, operand 0']
    #allocation4 [shape = 's32[2]{0}', space=sflag, size = 0x8, scoped, tag = 'scoped memory for tpu_custom_call.1']
    %12 = vsyncpa [#allocation4], 0
    %s13 = scalar_lea.sflag [#allocation4], 1
    %14 = vsyncpa %s13, 0
    loop: start=0, step=1, limit=4
    $region2: #{tpu_custom_call.1} parent=1 // loop_pre_header
      _
    $region3: #{tpu_custom_call.1} parent=1 // loop_header
      %s16 = sphi 0, %s20
      %p17 = scmp.ge.s32.totalorder %s16, 4
      %s26 = sphi 0, %s28
      %s29 = sphi 0, %s26
      %s30 = sphi 0, %s29
      %s46 = sphi 0, %s30
      %s50 = sphi 0, %s50
      %s52 = sphi 0, %s50
      %s53 = sphi 0, %s52
      %s67 = sphi 0, %s53
      %s71 = sphi 0, %s71
      %s73 = sphi 0, %s71
      %s74 = sphi 0, %s73
      %s88 = sphi 0, %s74
      %s92 = sphi 0, %s92
      %s94 = sphi 0, %s92
      %s95 = sphi 0, %s94
      %s109 = sphi 0, %s95
      %s113 = sphi 0, %s113
      %s115 = sphi 0, %s113
      %s116 = sphi 0, %s115
      %s130 = sphi 0, %s116
      %s136 = sphi 0, %s138
      %s139 = sphi 0, %s136
      %s140 = sphi 0, %s139
      %s156 = sphi 0, %s140
      %s162 = sphi 0, %s164
      %s165 = sphi 0, %s162
      %s166 = sphi 0, %s165
      %s182 = sphi 0, %s166
    $region4: #{tpu_custom_call.1} parent=1 // loop_header_branch
      %19 = sbr.rel (%p17) target = $region8
    $region5: #{tpu_custom_call.1} parent=1 // loop_body
      %s21 = ssub.s32 %s16, 1
      %s22 = ssub.s32 %s16, 2
      %s23 = sadd.s32 %s16, 1
      %s24 = ssub.s32 %s16, %s23
      %p25 = scmp.eq.s32.totalorder %s24, 0
      %s27 = sadd.s32 %s26, 1
      %s28 = scalar_select %p25, %s26, %s27
      %p31 = pneg %p25
      %p32 = scmp.eq.s32.totalorder %s16, 1
      %p33 = por %p31, %p32
      %p34 = scmp.ne.s32.totalorder %s26, %s29
      %p35 = scmp.eq.s32.totalorder %s16, 0
      %p36 = por %p34, %p35
      %p37 = scmp.ne.s32.totalorder %s26, %s29
      %p38 = scmp.eq.s32.totalorder %s21, 1
      %p39 = por %p37, %p38
      %p40 = scmp.ne.s32.totalorder %s29, %s30
      %p41 = scmp.eq.s32.totalorder %s21, 0
      %p42 = por %p40, %p41
      %p43 = scmp.ne.s32.totalorder %s29, %s30
      %p44 = scmp.eq.s32.totalorder %s22, 1
      %p45 = por %p43, %p44
      %p47 = scmp.ne.s32.totalorder %s30, %s46
      %p48 = scmp.eq.s32.totalorder %s22, 0
      %p49 = por %p47, %p48
      %s51 = sadd.s32 %s50, 1
      %p54 = scmp.eq.s32.totalorder %s16, 1
      %p55 = scmp.ne.s32.totalorder %s50, %s52
      %p56 = scmp.eq.s32.totalorder %s16, 0
      %p57 = por %p55, %p56
      %p58 = scmp.ne.s32.totalorder %s50, %s52
      %p59 = scmp.eq.s32.totalorder %s21, 1
      %p60 = por %p58, %p59
      %p61 = scmp.ne.s32.totalorder %s52, %s53
      %p62 = scmp.eq.s32.totalorder %s21, 0
      %p63 = por %p61, %p62
      %p64 = scmp.ne.s32.totalorder %s52, %s53
      %p65 = scmp.eq.s32.totalorder %s22, 1
      %p66 = por %p64, %p65
      %p68 = scmp.ne.s32.totalorder %s53, %s67
      %p69 = scmp.eq.s32.totalorder %s22, 0
      %p70 = por %p68, %p69
      %s72 = sadd.s32 %s71, 1
      %p75 = scmp.eq.s32.totalorder %s16, 1
      %p76 = scmp.ne.s32.totalorder %s71, %s73
      %p77 = scmp.eq.s32.totalorder %s16, 0
      %p78 = por %p76, %p77
      %p79 = scmp.ne.s32.totalorder %s71, %s73
      %p80 = scmp.eq.s32.totalorder %s21, 1
      %p81 = por %p79, %p80
      %p82 = scmp.ne.s32.totalorder %s73, %s74
      %p83 = scmp.eq.s32.totalorder %s21, 0
      %p84 = por %p82, %p83
      %p85 = scmp.ne.s32.totalorder %s73, %s74
      %p86 = scmp.eq.s32.totalorder %s22, 1
      %p87 = por %p85, %p86
      %p89 = scmp.ne.s32.totalorder %s74, %s88
      %p90 = scmp.eq.s32.totalorder %s22, 0
      %p91 = por %p89, %p90
      %s93 = sadd.s32 %s92, 1
      %p96 = scmp.eq.s32.totalorder %s16, 1
      %p97 = scmp.ne.s32.totalorder %s92, %s94
      %p98 = scmp.eq.s32.totalorder %s16, 0
      %p99 = por %p97, %p98
      %p100 = scmp.ne.s32.totalorder %s92, %s94
      %p101 = scmp.eq.s32.totalorder %s21, 1
      %p102 = por %p100, %p101
      %p103 = scmp.ne.s32.totalorder %s94, %s95
      %p104 = scmp.eq.s32.totalorder %s21, 0
      %p105 = por %p103, %p104
      %p106 = scmp.ne.s32.totalorder %s94, %s95
      %p107 = scmp.eq.s32.totalorder %s22, 1
      %p108 = por %p106, %p107
      %p110 = scmp.ne.s32.totalorder %s95, %s109
      %p111 = scmp.eq.s32.totalorder %s22, 0
      %p112 = por %p110, %p111
      %s114 = sadd.s32 %s113, 1
      %p117 = scmp.eq.s32.totalorder %s16, 1
      %p118 = scmp.ne.s32.totalorder %s113, %s115
      %p119 = scmp.eq.s32.totalorder %s16, 0
      %p120 = por %p118, %p119
      %p121 = scmp.ne.s32.totalorder %s113, %s115
      %p122 = scmp.eq.s32.totalorder %s21, 1
      %p123 = por %p121, %p122
      %p124 = scmp.ne.s32.totalorder %s115, %s116
      %p125 = scmp.eq.s32.totalorder %s21, 0
      %p126 = por %p124, %p125
      %p127 = scmp.ne.s32.totalorder %s115, %s116
      %p128 = scmp.eq.s32.totalorder %s22, 1
      %p129 = por %p127, %p128
      %p131 = scmp.ne.s32.totalorder %s116, %s130
      %p132 = scmp.eq.s32.totalorder %s22, 0
      %p133 = por %p131, %p132
      %s134 = ssub.s32 %s16, %s23
      %p135 = scmp.eq.s32.totalorder %s134, 0
      %s137 = sadd.s32 %s136, 1
      %s138 = scalar_select %p135, %s136, %s137
      %p141 = pneg %p135
      %p142 = scmp.eq.s32.totalorder %s16, 1
      %p143 = por %p141, %p142
      %p144 = scmp.ne.s32.totalorder %s136, %s139
      %p145 = scmp.eq.s32.totalorder %s16, 0
      %p146 = por %p144, %p145
      %p147 = scmp.ne.s32.totalorder %s136, %s139
      %p148 = scmp.eq.s32.totalorder %s21, 1
      %p149 = por %p147, %p148
      %p150 = scmp.ne.s32.totalorder %s139, %s140
      %p151 = scmp.eq.s32.totalorder %s21, 0
      %p152 = por %p150, %p151
      %p153 = scmp.ne.s32.totalorder %s139, %s140
      %p154 = scmp.eq.s32.totalorder %s22, 1
      %p155 = por %p153, %p154
      %p157 = scmp.ne.s32.totalorder %s140, %s156
      %p158 = scmp.eq.s32.totalorder %s22, 0
      %p159 = por %p157, %p158
      %s160 = ssub.s32 %s16, %s23
      %p161 = scmp.eq.s32.totalorder %s160, 0
      %s163 = sadd.s32 %s162, 1
      %s164 = scalar_select %p161, %s162, %s163
      %p167 = pneg %p161
      %p168 = scmp.eq.s32.totalorder %s16, 1
      %p169 = por %p167, %p168
      %p170 = scmp.ne.s32.totalorder %s162, %s165
      %p171 = scmp.eq.s32.totalorder %s16, 0
      %p172 = por %p170, %p171
      %p173 = scmp.ne.s32.totalorder %s162, %s165
      %p174 = scmp.eq.s32.totalorder %s21, 1
      %p175 = por %p173, %p174
      %p176 = scmp.ne.s32.totalorder %s165, %s166
      %p177 = scmp.eq.s32.totalorder %s21, 0
      %p178 = por %p176, %p177
      %p179 = scmp.ne.s32.totalorder %s165, %s166
      %p180 = scmp.eq.s32.totalorder %s22, 1
      %p181 = por %p179, %p180
      %p183 = scmp.ne.s32.totalorder %s166, %s182
      %p184 = scmp.eq.s32.totalorder %s22, 0
      %p185 = por %p183, %p184
      %p186 = scmp.le.s32.totalorder 1, %s16
      %p187 = scmp.lt.s32.totalorder %s16, 3
      %p188 = pnand %p186, %p187
      %p189 = pneg %p188
      // Predicated region
      $region9: #{tpu_custom_call.1} parent=5 // pred_check
        _
      $region10: #{tpu_custom_call.1} parent=5 // pred_check_branch
        %191 = sbr.rel (%p188) target = $region12
      $region11: #{tpu_custom_call.1} parent=5 // pred_region
        %s192 = ssub.s32 %s16, 1
        // Predicated region
        $region13: #{tpu_custom_call.1} parent=11 // pred_check
          %p193 = pneg %p63
        $region14: #{tpu_custom_call.1} parent=11 // pred_check_branch
          %195 = sbr.rel (%p193) target = $region16
        $region15: #{tpu_custom_call.1} parent=11 // pred_region
          _
        $region16: #{tpu_custom_call.1} parent=11 // pred_fallthru
          _
        // Predicated region
        $region17: #{tpu_custom_call.1} parent=11 // pred_check
          %p196 = pneg %p84
        $region18: #{tpu_custom_call.1} parent=11 // pred_check_branch
          %198 = sbr.rel (%p196) target = $region20
        $region19: #{tpu_custom_call.1} parent=11 // pred_region
          _
        $region20: #{tpu_custom_call.1} parent=11 // pred_fallthru
          _
        // Predicated region
        $region21: #{tpu_custom_call.1} parent=11 // pred_check
          %p199 = pneg %p105
        $region22: #{tpu_custom_call.1} parent=11 // pred_check_branch
          %201 = sbr.rel (%p199) target = $region24
        $region23: #{tpu_custom_call.1} parent=11 // pred_region
          _
        $region24: #{tpu_custom_call.1} parent=11 // pred_fallthru
          _
        // Predicated region
        $region25: #{tpu_custom_call.1} parent=11 // pred_check
          %p202 = pneg %p126
        $region26: #{tpu_custom_call.1} parent=11 // pred_check_branch
          %204 = sbr.rel (%p202) target = $region28
        $region27: #{tpu_custom_call.1} parent=11 // pred_region
          _
        $region28: #{tpu_custom_call.1} parent=11 // pred_fallthru
          _
      $region12: #{tpu_custom_call.1} parent=5 // pred_fallthru
        _
      %p205 = scmp.lt.s32.totalorder %s16, 2
      // Predicated region
      $region29: #{tpu_custom_call.1} parent=5 // pred_check
        %p206 = pneg %p205
      $region30: #{tpu_custom_call.1} parent=5 // pred_check_branch
        %208 = sbr.rel (%p206) target = $region32
      $region31: #{tpu_custom_call.1} parent=5 // pred_region
        // Predicated region
        $region33: #{tpu_custom_call.1} parent=31 // pred_check
          %p209 = pneg %p36
        $region34: #{tpu_custom_call.1} parent=31 // pred_check_branch
          %211 = sbr.rel (%p209) target = $region36
        $region35: #{tpu_custom_call.1} parent=31 // pred_region
          %p212 = scmp.lt.s32.totalorder %s16, 1
          %s213 = scalar_select %p212, %s16, 1
          %s214 = smul.addr %s213, 16
          %s215 = smul.addr %s214, 8
          %s216 = scalar_lea.vmem %s0, %s215
        $region36: #{tpu_custom_call.1} parent=31 // pred_fallthru
          _
      $region32: #{tpu_custom_call.1} parent=5 // pred_fallthru
        _
      %p217 = scmp.le.s32.totalorder 1, %s16
      %p218 = scmp.lt.s32.totalorder %s16, 3
      %p219 = pnand %p217, %p218
      %p220 = pneg %p219
      // Predicated region
      $region37: #{tpu_custom_call.1} parent=5 // pred_check
        _
      $region38: #{tpu_custom_call.1} parent=5 // pred_check_branch
        %222 = sbr.rel (%p219) target = $region40
      $region39: #{tpu_custom_call.1} parent=5 // pred_region
        %s223 = ssub.s32 %s16, 1
        %p224 = scmp.lt.s32.totalorder %s21, 1
        %s225 = scalar_select %p224, %s21, 1
        %s226 = smul.addr %s225, 16
        %s227 = smul.addr %s226, 8
        %s228 = scalar_lea.vmem %s0, %s227
        %p229 = pneg %p42
        %p230 = pneg %p39
        %p231 = pneg %p63
        %p232 = pneg %p60
        %p233 = pneg %p84
        %p234 = pneg %p81
        %p235 = pneg %p105
        %p236 = pneg %p102
        %p237 = pneg %p126
        %p238 = pneg %p123
        %p239 = pneg %p152
        %p240 = pneg %p149
        %s241 = sand.u32 %s139, 1
        %s242 = scalar_lea.sflag [#allocation4], %s241
        %s243 = sand.u32 %s139, 1
        %s244 = smul.addr %s243, 64
        %s245 = scalar_lea.vmem [#allocation3], %s244
        %p246 = pneg %p178
        %p247 = pneg %p175
        %p248 = scmp.lt.s32.totalorder %s21, 1
        %s249 = scalar_select %p248, %s21, 1
        %s250 = smul.addr %s249, 8
        %s251 = smul.addr %s250, 8
        %s252 = scalar_lea.vmem %s6, %s251
        %p253 = scmp.lt.s32.totalorder %s21, 1
        %s254 = scalar_select %p253, %s21, 1
        %s255 = smul.addr %s254, 16
        %s256 = smul.addr %s255, 8
        %s257 = scalar_lea.vmem %s0, %s256
        %p258 = scmp.lt.s32.totalorder %s21, 1
        %s259 = scalar_select %p258, %s21, 1
        %s260 = smul.addr %s259, 8
        %s261 = smul.addr %s260, 8
        %s262 = scalar_lea.vmem %s6, %s261
        %v263 = vld [vmem:[%s257] sm:$0xff]
        %v264 = vld [vmem:[%s257 + $0x8] sm:$0xff]
        %v265 = vld [vmem:[%s257 + $0x10] sm:$0xff]
        %v266 = vld [vmem:[%s257 + $0x18] sm:$0xff]
        %v267 = vld [vmem:[%s257 + $0x20] sm:$0xff]
        %v268 = vld [vmem:[%s257 + $0x28] sm:$0xff]
        %v269 = vld [vmem:[%s257 + $0x30] sm:$0xff]
        %v270 = vld [vmem:[%s257 + $0x38] sm:$0xff]
        %v271 = vld [vmem:[%s257 + $0x40] sm:$0xff]
        %v272 = vld [vmem:[%s257 + $0x48] sm:$0xff]
        %v273 = vld [vmem:[%s257 + $0x50] sm:$0xff]
        %v274 = vld [vmem:[%s257 + $0x58] sm:$0xff]
        %v275 = vld [vmem:[%s257 + $0x60] sm:$0xff]
        %v276 = vld [vmem:[%s257 + $0x68] sm:$0xff]
        %v277 = vld [vmem:[%s257 + $0x70] sm:$0xff]
        %v278 = vld [vmem:[%s257 + $0x78] sm:$0xff]
        %v279 = vld [vmem:[%s1] sm:$0x1]
        %v281 = vlaneseq
        %v282 = vshrl.u32 %v281, 7
        %v283 = vsub.s32 0, %v282
        %v284 = vrot.slane %v279, %v283
        %v286 = vmul.f32 %v263, %v284
        %v287 = vmul.f32 %v264, %v284
        %v288 = vmul.f32 %v265, %v284
        %v289 = vmul.f32 %v266, %v284
        %v290 = vmul.f32 %v267, %v284
        %v291 = vmul.f32 %v268, %v284
        %v292 = vmul.f32 %v269, %v284
        %v293 = vmul.f32 %v270, %v284
        %v294 = vmul.f32 %v271, %v284
        %v295 = vmul.f32 %v272, %v284
        %v296 = vmul.f32 %v273, %v284
        %v297 = vmul.f32 %v274, %v284
        %v298 = vmul.f32 %v275, %v284
        %v299 = vmul.f32 %v276, %v284
        %v300 = vmul.f32 %v277, %v284
        %v301 = vmul.f32 %v278, %v284
        %v302 = vld [vmem:[%s2] sm:$0x1]
        %v304 = vlaneseq
        %v305 = vshrl.u32 %v304, 7
        %v306 = vsub.s32 0, %v305
        %v307 = vrot.slane %v302, %v306
        %v309 = vadd.f32 %v286, %v307
        %v310 = vadd.f32 %v287, %v307
        %v311 = vadd.f32 %v288, %v307
        %v312 = vadd.f32 %v289, %v307
        %v313 = vadd.f32 %v290, %v307
        %v314 = vadd.f32 %v291, %v307
        %v315 = vadd.f32 %v292, %v307
        %v316 = vadd.f32 %v293, %v307
        %v317 = vadd.f32 %v294, %v307
        %v318 = vadd.f32 %v295, %v307
        %v319 = vadd.f32 %v296, %v307
        %v320 = vadd.f32 %v297, %v307
        %v321 = vadd.f32 %v298, %v307
        %v322 = vadd.f32 %v299, %v307
        %v323 = vadd.f32 %v300, %v307
        %v324 = vadd.f32 %v301, %v307
        %v325 = vmax.f32 %v309, 0.0
        %v326 = vmax.f32 %v310, 0.0
        %v327 = vmax.f32 %v311, 0.0
        %v328 = vmax.f32 %v312, 0.0
        %v329 = vmax.f32 %v313, 0.0
        %v330 = vmax.f32 %v314, 0.0
        %v331 = vmax.f32 %v315, 0.0
        %v332 = vmax.f32 %v316, 0.0
        %v333 = vmax.f32 %v317, 0.0
        %v334 = vmax.f32 %v318, 0.0
        %v335 = vmax.f32 %v319, 0.0
        %v336 = vmax.f32 %v320, 0.0
        %v337 = vmax.f32 %v321, 0.0
        %v338 = vmax.f32 %v322, 0.0
        %v339 = vmax.f32 %v323, 0.0
        %v340 = vmax.f32 %v324, 0.0
        %vm341 = vcmask 31744
        %342 = vst.msk [vmem:[%s262] sm:$0xff] %vm341, %v325
        %343 = vst.msk [vmem:[%s262 + $0x8] sm:$0xff] %vm341, %v327
        %344 = vst.msk [vmem:[%s262 + $0x10] sm:$0xff] %vm341, %v329
        %345 = vst.msk [vmem:[%s262 + $0x18] sm:$0xff] %vm341, %v331
        %346 = vst.msk [vmem:[%s262 + $0x20] sm:$0xff] %vm341, %v333
        %347 = vst.msk [vmem:[%s262 + $0x28] sm:$0xff] %vm341, %v335
        %348 = vst.msk [vmem:[%s262 + $0x30] sm:$0xff] %vm341, %v337
        %349 = vst.msk [vmem:[%s262 + $0x38] sm:$0xff] %vm341, %v339
        %vm350 = vcmask 64512
        %351 = vst.msk [vmem:[#allocation2] sm:$0xff] %vm350, 0.0
        %vm352 = vcmask 57344
        %353 = vst.msk [vmem:[#allocation2 + $0x8] sm:$0x1] %vm352, 0.0
        %354 = vst.msk [vmem:[#allocation2 + $0x10] sm:$0xff] %vm350, 0.0
        %355 = vst.msk [vmem:[#allocation2 + $0x18] sm:$0x1] %vm352, 0.0
        %356 = vst.msk [vmem:[#allocation2 + $0x20] sm:$0xff] %vm350, 0.0
        %357 = vst.msk [vmem:[#allocation2 + $0x28] sm:$0x1] %vm352, 0.0
        %358 = vst.msk [vmem:[#allocation2 + $0x30] sm:$0xff] %vm350, 0.0
        %359 = vst.msk [vmem:[#allocation2 + $0x38] sm:$0x1] %vm352, 0.0
        %360 = vst.msk [vmem:[#allocation2 + $0x40] sm:$0xff] %vm350, 0.0
        %361 = vst.msk [vmem:[#allocation2 + $0x48] sm:$0x1] %vm352, 0.0
        %362 = vst.msk [vmem:[#allocation2 + $0x50] sm:$0xff] %vm350, 0.0
        %363 = vst.msk [vmem:[#allocation2 + $0x58] sm:$0x1] %vm352, 0.0
        %364 = vst.msk [vmem:[#allocation2 + $0x60] sm:$0xff] %vm350, 0.0
        %365 = vst.msk [vmem:[#allocation2 + $0x68] sm:$0x1] %vm352, 0.0
        %366 = vst.msk [vmem:[#allocation2 + $0x70] sm:$0xff] %vm350, 0.0
        %367 = vst.msk [vmem:[#allocation2 + $0x78] sm:$0x1] %vm352, 0.0
        %368 = vst.msk [vmem:[#allocation2 + $0x80] sm:$0xff] %vm350, 0.0
        %369 = vst.msk [vmem:[#allocation2 + $0x88] sm:$0x1] %vm352, 0.0
        %370 = vst.msk [vmem:[#allocation2 + $0x90] sm:$0xff] %vm350, 0.0
        %371 = vst.msk [vmem:[#allocation2 + $0x98] sm:$0x1] %vm352, 0.0
        %372 = vst.msk [vmem:[#allocation2 + $0xa0] sm:$0xff] %vm350, 0.0
        %373 = vst.msk [vmem:[#allocation2 + $0xa8] sm:$0x1] %vm352, 0.0
        %374 = vst.msk [vmem:[#allocation2 + $0xb0] sm:$0xff] %vm350, 0.0
        %375 = vst.msk [vmem:[#allocation2 + $0xb8] sm:$0x1] %vm352, 0.0
        %376 = vst.msk [vmem:[#allocation2 + $0xc0] sm:$0xff] %vm350, 0.0
        %377 = vst.msk [vmem:[#allocation2 + $0xc8] sm:$0x1] %vm352, 0.0
        %378 = vst.msk [vmem:[#allocation2 + $0xd0] sm:$0xff] %vm350, 0.0
        %379 = vst.msk [vmem:[#allocation2 + $0xd8] sm:$0x1] %vm352, 0.0
        %380 = vst.msk [vmem:[#allocation2 + $0xe0] sm:$0xff] %vm350, 0.0
        %381 = vst.msk [vmem:[#allocation2 + $0xe8] sm:$0x1] %vm352, 0.0
        %382 = vst.msk [vmem:[#allocation2 + $0xf0] sm:$0xff] %vm350, 0.0
        %383 = vst.msk [vmem:[#allocation2 + $0xf8] sm:$0x1] %vm352, 0.0
        %384 = vst.msk [vmem:[#allocation2 + $0x100] sm:$0xff] %vm350, 0.0
        %385 = vst.msk [vmem:[#allocation2 + $0x108] sm:$0x1] %vm352, 0.0
        %386 = vst.msk [vmem:[#allocation2 + $0x110] sm:$0xff] %vm350, 0.0
        %387 = vst.msk [vmem:[#allocation2 + $0x118] sm:$0x1] %vm352, 0.0
        %s388 = scalar_lea.vmem [#allocation2], 16
        %389 = vst.msk [vmem:[%s388 + $0x1] sm:$0xff] %vm350, %v325
        %390 = vst.msk [vmem:[%s388 + $0x21] sm:$0xff] %vm350, %v327
        %391 = vst.msk [vmem:[%s388 + $0x41] sm:$0xff] %vm350, %v329
        %392 = vst.msk [vmem:[%s388 + $0x61] sm:$0xff] %vm350, %v331
        %393 = vst.msk [vmem:[%s388 + $0x81] sm:$0xff] %vm350, %v333
        %394 = vst.msk [vmem:[%s388 + $0xa1] sm:$0xff] %vm350, %v335
        %395 = vst.msk [vmem:[%s388 + $0xc1] sm:$0xff] %vm350, %v337
        %396 = vst.msk [vmem:[%s388 + $0xe1] sm:$0xff] %vm350, %v339
        %s397 = scalar_lea.vmem [#allocation2], 32
        %398 = vst.msk [vmem:[%s397 + $0x1] sm:$0xff] %vm350, %v326
        %399 = vst.msk [vmem:[%s397 + $0x21] sm:$0xff] %vm350, %v328
        %400 = vst.msk [vmem:[%s397 + $0x41] sm:$0xff] %vm350, %v330
        %401 = vst.msk [vmem:[%s397 + $0x61] sm:$0xff] %vm350, %v332
        %402 = vst.msk [vmem:[%s397 + $0x81] sm:$0xff] %vm350, %v334
        %403 = vst.msk [vmem:[%s397 + $0xa1] sm:$0xff] %vm350, %v336
        %404 = vst.msk [vmem:[%s397 + $0xc1] sm:$0xff] %vm350, %v338
        %405 = vst.msk [vmem:[%s397 + $0xe1] sm:$0xff] %vm350, %v340
        %v406 = vld [vmem:[%s3] sm:$0xff]
        %v407 = vld [vmem:[%s3 + $0x8] sm:$0xff]
        %v408 = vld [vmem:[%s3 + $0x10] sm:$0xff]
        %v409 = vld [vmem:[%s4] sm:$0xff]
        %v410 = vld [vmem:[%s4 + $0x8] sm:$0xff]
        %v411 = vld [vmem:[%s4 + $0x10] sm:$0xff]
        %v412 = vld [vmem:[#allocation2] sm:$0xff]
        %v413 = vld [vmem:[#allocation2 + $0x20] sm:$0xff]
        %v414 = vld [vmem:[#allocation2 + $0x40] sm:$0xff]
        %v415 = vld [vmem:[#allocation2 + $0x60] sm:$0xff]
        %v416 = vld [vmem:[#allocation2 + $0x80] sm:$0xff]
        %v417 = vld [vmem:[#allocation2 + $0xa0] sm:$0xff]
        %v418 = vld [vmem:[#allocation2 + $0xc0] sm:$0xff]
        %v419 = vld [vmem:[#allocation2 + $0xe0] sm:$0xff]
        %v420 = vld [vmem:[#allocation2 + $0x1] sm:$0xff]
        %v421 = vld [vmem:[#allocation2 + $0x21] sm:$0xff]
        %v422 = vld [vmem:[#allocation2 + $0x41] sm:$0xff]
        %v423 = vld [vmem:[#allocation2 + $0x61] sm:$0xff]
        %v424 = vld [vmem:[#allocation2 + $0x81] sm:$0xff]
        %v425 = vld [vmem:[#allocation2 + $0xa1] sm:$0xff]
        %v426 = vld [vmem:[#allocation2 + $0xc1] sm:$0xff]
        %v427 = vld [vmem:[#allocation2 + $0xe1] sm:$0xff]
        %v429 = vsel %vm350, %v420, 0
        %v432 = vsel %vm350, %v421, 0
        %v435 = vsel %vm350, %v422, 0
        %v438 = vsel %vm350, %v423, 0
        %v441 = vsel %vm350, %v424, 0
        %v444 = vsel %vm350, %v425, 0
        %v447 = vsel %vm350, %v426, 0
        %v450 = vsel %vm350, %v427, 0
        %452 = vmatprep.subr.mxu0 0.0
        %453 = vmatpush1.msra.mxu0 %v406
        %454 = vmatprep.subr.mxu0 0.0
        %455 = vmatpush1.msra.mxu0 0.0
        %456 = vmatprep.subr.mxu0 0.0
        %457 = vmatpush1.msra.mxu0 0.0
        %458 = vmatprep.subr.mxu0 0.0
        %459 = vmatpush1.msra.mxu0 0.0
        %460 = vmatprep.subr.mxu0 0.0
        %461 = vmatpush1.msra.mxu0 0.0
        %462 = vmatprep.subr.mxu0 0.0
        %463 = vmatpush1.msra.mxu0 0.0
        %464 = vmatprep.subr.mxu0 0.0
        %465 = vmatpush1.msra.mxu0 0.0
        %466 = vmatprep.subr.mxu0 0.0
        %467 = vmatpush1.msra.mxu0 0.0
        %468 = vmatprep.subr.mxu0 0.0
        %469 = vmatpush1.msra.mxu0 0.0
        %470 = vmatprep.subr.mxu0 0.0
        %471 = vmatpush1.msra.mxu0 0.0
        %472 = vmatprep.subr.mxu0 0.0
        %473 = vmatpush1.msra.mxu0 0.0
        %474 = vmatprep.subr.mxu0 0.0
        %475 = vmatpush1.msra.mxu0 0.0
        %476 = vmatprep.subr.mxu0 0.0
        %477 = vmatpush1.msra.mxu0 0.0
        %478 = vmatprep.subr.mxu0 0.0
        %479 = vmatpush1.msra.mxu0 0.0
        %480 = vmatprep.subr.mxu0 0.0
        %481 = vmatpush1.msra.mxu0 0.0
        %482 = vmatprep.subr.mxu0 0.0
        %483 = vmatpush1.msra.mxu0 0.0
        %484 = vmatprep.subr.mxu0 0.0
        %485 = vmatpush1.msra.mxu0 0.0
        %486 = vmatprep.subr.mxu0 0.0
        %487 = vmatpush1.msra.mxu0 0.0
        %488 = vmatprep.subr.mxu0 0.0
        %489 = vmatpush1.msra.mxu0 0.0
        %490 = vmatprep.subr.mxu0 0.0
        %491 = vmatpush1.msra.mxu0 0.0
        %492 = vmatprep.subr.mxu0 0.0
        %493 = vmatpush1.msra.mxu0 0.0
        %494 = vmatprep.subr.mxu0 0.0
        %495 = vmatpush1.msra.mxu0 0.0
        %496 = vmatprep.subr.mxu0 0.0
        %497 = vmatpush1.msra.mxu0 0.0
        %498 = vmatprep.subr.mxu0 0.0
        %499 = vmatpush1.msra.mxu0 0.0
        %500 = vmatprep.subr.mxu0 0.0
        %501 = vmatpush1.msra.mxu0 0.0
        %502 = vmatprep.subr.mxu0 0.0
        %503 = vmatpush1.msra.mxu0 0.0
        %504 = vmatprep.subr.mxu0 0.0
        %505 = vmatpush1.msra.mxu0 0.0
        %506 = vmatprep.subr.mxu0 0.0
        %507 = vmatpush1.msra.mxu0 0.0
        %508 = vmatprep.subr.mxu0 0.0
        %509 = vmatpush1.msra.mxu0 0.0
        %510 = vmatprep.subr.mxu0 0.0
        %511 = vmatpush1.msra.mxu0 0.0
        %512 = vmatprep.subr.mxu0 0.0
        %513 = vmatpush1.msra.mxu0 0.0
        %514 = vmatprep.subr.mxu0 0.0
        %515 = vmatpush1.msra.mxu0 0.0
        %516 = vmatprep.mubr.f32.mxu0 0.0
        %517 = vmatmul.mubr.f32.gmra.mrb[0].mxu0 %v429
        %v518 = vpop.f32.mrb[0].mxu0
        %v519 = vadd.f32 0.0, %v518
        %v520 = vpop.f32.mrb[0].mxu0
        %521 = vmatprep.mubr.f32.mxu0 0.0
        %522 = vmatmul.mubr.f32.gmra.mrb[0].mxu0 %v432
        %v523 = vpop.f32.mrb[0].mxu0
        %v524 = vadd.f32 0.0, %v523
        %v525 = vpop.f32.mrb[0].mxu0
        %526 = vmatprep.mubr.f32.mxu0 0.0
        %527 = vmatmul.mubr.f32.gmra.mrb[0].mxu0 %v435
        %v528 = vpop.f32.mrb[0].mxu0
        %v529 = vadd.f32 0.0, %v528
        %v530 = vpop.f32.mrb[0].mxu0
        %531 = vmatprep.mubr.f32.mxu0 0.0
        %532 = vmatmul.mubr.f32.gmra.mrb[0].mxu0 %v438
        %v533 = vpop.f32.mrb[0].mxu0
        %v534 = vadd.f32 0.0, %v533
        %v535 = vpop.f32.mrb[0].mxu0
        %536 = vmatprep.mubr.f32.mxu0 0.0
        %537 = vmatmul.mubr.f32.gmra.mrb[0].mxu0 %v441
        %v538 = vpop.f32.mrb[0].mxu0
        %v539 = vadd.f32 0.0, %v538
        %v540 = vpop.f32.mrb[0].mxu0
        %541 = vmatprep.mubr.f32.mxu0 0.0
        %542 = vmatmul.mubr.f32.gmra.mrb[0].mxu0 %v444
        %v543 = vpop.f32.mrb[0].mxu0
        %v544 = vadd.f32 0.0, %v543
        %v545 = vpop.f32.mrb[0].mxu0
        %546 = vmatprep.mubr.f32.mxu0 0.0
        %547 = vmatmul.mubr.f32.gmra.mrb[0].mxu0 %v447
        %v548 = vpop.f32.mrb[0].mxu0
        %v549 = vadd.f32 0.0, %v548
        %v550 = vpop.f32.mrb[0].mxu0
        %551 = vmatprep.mubr.f32.mxu0 0.0
        %552 = vmatmul.mubr.f32.gmra.mrb[0].mxu0 %v450
        %v553 = vpop.f32.mrb[0].mxu0
        %v554 = vadd.f32 0.0, %v553
        %v555 = vpop.f32.mrb[0].mxu0
        %556 = vdwg.mxu0
        %v558 = vsel %vm350, %v412, 0
        %v561 = vsel %vm350, %v413, 0
        %v564 = vsel %vm350, %v414, 0
        %v567 = vsel %vm350, %v415, 0
        %v570 = vsel %vm350, %v416, 0
        %v573 = vsel %vm350, %v417, 0
        %v576 = vsel %vm350, %v418, 0
        %v579 = vsel %vm350, %v419, 0
        %581 = vmatprep.subr.mxu0 0.0
        %582 = vmatpush1.msra.mxu0 %v409
        %583 = vmatprep.subr.mxu0 0.0
        %584 = vmatpush1.msra.mxu0 0.0
        %585 = vmatprep.subr.mxu0 0.0
        %586 = vmatpush1.msra.mxu0 0.0
        %587 = vmatprep.subr.mxu0 0.0
        %588 = vmatpush1.msra.mxu0 0.0
        %589 = vmatprep.subr.mxu0 0.0
        %590 = vmatpush1.msra.mxu0 0.0
        %591 = vmatprep.subr.mxu0 0.0
        %592 = vmatpush1.msra.mxu0 0.0
        %593 = vmatprep.subr.mxu0 0.0
        %594 = vmatpush1.msra.mxu0 0.0
        %595 = vmatprep.subr.mxu0 0.0
        %596 = vmatpush1.msra.mxu0 0.0
        %597 = vmatprep.subr.mxu0 0.0
        %598 = vmatpush1.msra.mxu0 0.0
        %599 = vmatprep.subr.mxu0 0.0
        %600 = vmatpush1.msra.mxu0 0.0
        %601 = vmatprep.subr.mxu0 0.0
        %602 = vmatpush1.msra.mxu0 0.0
        %603 = vmatprep.subr.mxu0 0.0
        %604 = vmatpush1.msra.mxu0 0.0
        %605 = vmatprep.subr.mxu0 0.0
        %606 = vmatpush1.msra.mxu0 0.0
        %607 = vmatprep.subr.mxu0 0.0
        %608 = vmatpush1.msra.mxu0 0.0
        %609 = vmatprep.subr.mxu0 0.0
        %610 = vmatpush1.msra.mxu0 0.0
        %611 = vmatprep.subr.mxu0 0.0
        %612 = vmatpush1.msra.mxu0 0.0
        %613 = vmatprep.subr.mxu0 0.0
        %614 = vmatpush1.msra.mxu0 0.0
        %615 = vmatprep.subr.mxu0 0.0
        %616 = vmatpush1.msra.mxu0 0.0
        %617 = vmatprep.subr.mxu0 0.0
        %618 = vmatpush1.msra.mxu0 0.0
        %619 = vmatprep.subr.mxu0 0.0
        %620 = vmatpush1.msra.mxu0 0.0
        %621 = vmatprep.subr.mxu0 0.0
        %622 = vmatpush1.msra.mxu0 0.0
        %623 = vmatprep.subr.mxu0 0.0
        %624 = vmatpush1.msra.mxu0 0.0
        %625 = vmatprep.subr.mxu0 0.0
        %626 = vmatpush1.msra.mxu0 0.0
        %627 = vmatprep.subr.mxu0 0.0
        %628 = vmatpush1.msra.mxu0 0.0
        %629 = vmatprep.subr.mxu0 0.0
        %630 = vmatpush1.msra.mxu0 0.0
        %631 = vmatprep.subr.mxu0 0.0
        %632 = vmatpush1.msra.mxu0 0.0
        %633 = vmatprep.subr.mxu0 0.0
        %634 = vmatpush1.msra.mxu0 0.0
        %635 = vmatprep.subr.mxu0 0.0
        %636 = vmatpush1.msra.mxu0 0.0
        %637 = vmatprep.subr.mxu0 0.0
        %638 = vmatpush1.msra.mxu0 0.0
        %639 = vmatprep.subr.mxu0 0.0
        %640 = vmatpush1.msra.mxu0 0.0
        %641 = vmatprep.subr.mxu0 0.0
        %642 = vmatpush1.msra.mxu0 0.0
        %643 = vmatprep.subr.mxu0 0.0
        %644 = vmatpush1.msra.mxu0 0.0
        %645 = vmatprep.mubr.f32.mxu0 0.0
        %646 = vmatmul.mubr.f32.gmra.mrb[0].mxu0 %v558
        %v647 = vpop.f32.mrb[0].mxu0
        %v648 = vadd.f32 %v519, %v647
        %v649 = vpop.f32.mrb[0].mxu0
        %650 = vmatprep.mubr.f32.mxu0 0.0
        %651 = vmatmul.mubr.f32.gmra.mrb[0].mxu0 %v561
        %v652 = vpop.f32.mrb[0].mxu0
        %v653 = vadd.f32 %v524, %v652
        %v654 = vpop.f32.mrb[0].mxu0
        %655 = vmatprep.mubr.f32.mxu0 0.0
        %656 = vmatmul.mubr.f32.gmra.mrb[0].mxu0 %v564
        %v657 = vpop.f32.mrb[0].mxu0
        %v658 = vadd.f32 %v529, %v657
        %v659 = vpop.f32.mrb[0].mxu0
        %660 = vmatprep.mubr.f32.mxu0 0.0
        %661 = vmatmul.mubr.f32.gmra.mrb[0].mxu0 %v567
        %v662 = vpop.f32.mrb[0].mxu0
        %v663 = vadd.f32 %v534, %v662
        %v664 = vpop.f32.mrb[0].mxu0
        %665 = vmatprep.mubr.f32.mxu0 0.0
        %666 = vmatmul.mubr.f32.gmra.mrb[0].mxu0 %v570
        %v667 = vpop.f32.mrb[0].mxu0
        %v668 = vadd.f32 %v539, %v667
        %v669 = vpop.f32.mrb[0].mxu0
        %670 = vmatprep.mubr.f32.mxu0 0.0
        %671 = vmatmul.mubr.f32.gmra.mrb[0].mxu0 %v573
        %v672 = vpop.f32.mrb[0].mxu0
        %v673 = vadd.f32 %v544, %v672
        %v674 = vpop.f32.mrb[0].mxu0
        %675 = vmatprep.mubr.f32.mxu0 0.0
        %676 = vmatmul.mubr.f32.gmra.mrb[0].mxu0 %v576
        %v677 = vpop.f32.mrb[0].mxu0
        %v678 = vadd.f32 %v549, %v677
        %v679 = vpop.f32.mrb[0].mxu0
        %680 = vmatprep.mubr.f32.mxu0 0.0
        %681 = vmatmul.mubr.f32.gmra.mrb[0].mxu0 %v579
        %v682 = vpop.f32.mrb[0].mxu0
        %v683 = vadd.f32 %v554, %v682
        %v684 = vpop.f32.mrb[0].mxu0
        %685 = vdwg.mxu0
        %v686 = vld [vmem:[%s388] sm:$0xff]
        %v687 = vld [vmem:[%s388 + $0x20] sm:$0xff]
        %v688 = vld [vmem:[%s388 + $0x40] sm:$0xff]
        %v689 = vld [vmem:[%s388 + $0x60] sm:$0xff]
        %v690 = vld [vmem:[%s388 + $0x80] sm:$0xff]
        %v691 = vld [vmem:[%s388 + $0xa0] sm:$0xff]
        %v692 = vld [vmem:[%s388 + $0xc0] sm:$0xff]
        %v693 = vld [vmem:[%s388 + $0xe0] sm:$0xff]
        %v694 = vld [vmem:[%s388 + $0x1] sm:$0xff]
        %v695 = vld [vmem:[%s388 + $0x21] sm:$0xff]
        %v696 = vld [vmem:[%s388 + $0x41] sm:$0xff]
        %v697 = vld [vmem:[%s388 + $0x61] sm:$0xff]
        %v698 = vld [vmem:[%s388 + $0x81] sm:$0xff]
        %v699 = vld [vmem:[%s388 + $0xa1] sm:$0xff]
        %v700 = vld [vmem:[%s388 + $0xc1] sm:$0xff]
        %v701 = vld [vmem:[%s388 + $0xe1] sm:$0xff]
        %v703 = vsel %vm350, %v686, 0
        %v706 = vsel %vm350, %v687, 0
        %v709 = vsel %vm350, %v688, 0
        %v712 = vsel %vm350, %v689, 0
        %v715 = vsel %vm350, %v690, 0
        %v718 = vsel %vm350, %v691, 0
        %v721 = vsel %vm350, %v692, 0
        %v724 = vsel %vm350, %v693, 0
        %726 = vmatprep.subr.mxu0 0.0
        %727 = vmatpush1.msra.mxu0 %v410
        %728 = vmatprep.subr.mxu0 0.0
        %729 = vmatpush1.msra.mxu0 0.0
        %730 = vmatprep.subr.mxu0 0.0
        %731 = vmatpush1.msra.mxu0 0.0
        %732 = vmatprep.subr.mxu0 0.0
        %733 = vmatpush1.msra.mxu0 0.0
        %734 = vmatprep.subr.mxu0 0.0
        %735 = vmatpush1.msra.mxu0 0.0
        %736 = vmatprep.subr.mxu0 0.0
        %737 = vmatpush1.msra.mxu0 0.0
        %738 = vmatprep.subr.mxu0 0.0
        %739 = vmatpush1.msra.mxu0 0.0
        %740 = vmatprep.subr.mxu0 0.0
        %741 = vmatpush1.msra.mxu0 0.0
        %742 = vmatprep.subr.mxu0 0.0
        %743 = vmatpush1.msra.mxu0 0.0
        %744 = vmatprep.subr.mxu0 0.0
        %745 = vmatpush1.msra.mxu0 0.0
        %746 = vmatprep.subr.mxu0 0.0
        %747 = vmatpush1.msra.mxu0 0.0
        %748 = vmatprep.subr.mxu0 0.0
        %749 = vmatpush1.msra.mxu0 0.0
        %750 = vmatprep.subr.mxu0 0.0
        %751 = vmatpush1.msra.mxu0 0.0
        %752 = vmatprep.subr.mxu0 0.0
        %753 = vmatpush1.msra.mxu0 0.0
        %754 = vmatprep.subr.mxu0 0.0
        %755 = vmatpush1.msra.mxu0 0.0
        %756 = vmatprep.subr.mxu0 0.0
        %757 = vmatpush1.msra.mxu0 0.0
        %758 = vmatprep.subr.mxu0 0.0
        %759 = vmatpush1.msra.mxu0 0.0
        %760 = vmatprep.subr.mxu0 0.0
        %761 = vmatpush1.msra.mxu0 0.0
        %762 = vmatprep.subr.mxu0 0.0
        %763 = vmatpush1.msra.mxu0 0.0
        %764 = vmatprep.subr.mxu0 0.0
        %765 = vmatpush1.msra.mxu0 0.0
        %766 = vmatprep.subr.mxu0 0.0
        %767 = vmatpush1.msra.mxu0 0.0
        %768 = vmatprep.subr.mxu0 0.0
        %769 = vmatpush1.msra.mxu0 0.0
        %770 = vmatprep.subr.mxu0 0.0
        %771 = vmatpush1.msra.mxu0 0.0
        %772 = vmatprep.subr.mxu0 0.0
        %773 = vmatpush1.msra.mxu0 0.0
        %774 = vmatprep.subr.mxu0 0.0
        %775 = vmatpush1.msra.mxu0 0.0
        %776 = vmatprep.subr.mxu0 0.0
        %777 = vmatpush1.msra.mxu0 0.0
        %778 = vmatprep.subr.mxu0 0.0
        %779 = vmatpush1.msra.mxu0 0.0
        %780 = vmatprep.subr.mxu0 0.0
        %781 = vmatpush1.msra.mxu0 0.0
        %782 = vmatprep.subr.mxu0 0.0
        %783 = vmatpush1.msra.mxu0 0.0
        %784 = vmatprep.subr.mxu0 0.0
        %785 = vmatpush1.msra.mxu0 0.0
        %786 = vmatprep.subr.mxu0 0.0
        %787 = vmatpush1.msra.mxu0 0.0
        %788 = vmatprep.subr.mxu0 0.0
        %789 = vmatpush1.msra.mxu0 0.0
        %790 = vmatprep.mubr.f32.mxu0 0.0
        %791 = vmatmul.mubr.f32.gmra.mrb[0].mxu0 %v703
        %v792 = vpop.f32.mrb[0].mxu0
        %v793 = vadd.f32 0.0, %v792
        %v794 = vpop.f32.mrb[0].mxu0
        %795 = vmatprep.mubr.f32.mxu0 0.0
        %796 = vmatmul.mubr.f32.gmra.mrb[0].mxu0 %v706
        %v797 = vpop.f32.mrb[0].mxu0
        %v798 = vadd.f32 0.0, %v797
        %v799 = vpop.f32.mrb[0].mxu0
        %800 = vmatprep.mubr.f32.mxu0 0.0
        %801 = vmatmul.mubr.f32.gmra.mrb[0].mxu0 %v709
        %v802 = vpop.f32.mrb[0].mxu0
        %v803 = vadd.f32 0.0, %v802
        %v804 = vpop.f32.mrb[0].mxu0
        %805 = vmatprep.mubr.f32.mxu0 0.0
        %806 = vmatmul.mubr.f32.gmra.mrb[0].mxu0 %v712
        %v807 = vpop.f32.mrb[0].mxu0
        %v808 = vadd.f32 0.0, %v807
        %v809 = vpop.f32.mrb[0].mxu0
        %810 = vmatprep.mubr.f32.mxu0 0.0
        %811 = vmatmul.mubr.f32.gmra.mrb[0].mxu0 %v715
        %v812 = vpop.f32.mrb[0].mxu0
        %v813 = vadd.f32 0.0, %v812
        %v814 = vpop.f32.mrb[0].mxu0
        %815 = vmatprep.mubr.f32.mxu0 0.0
        %816 = vmatmul.mubr.f32.gmra.mrb[0].mxu0 %v718
        %v817 = vpop.f32.mrb[0].mxu0
        %v818 = vadd.f32 0.0, %v817
        %v819 = vpop.f32.mrb[0].mxu0
        %820 = vmatprep.mubr.f32.mxu0 0.0
        %821 = vmatmul.mubr.f32.gmra.mrb[0].mxu0 %v721
        %v822 = vpop.f32.mrb[0].mxu0
        %v823 = vadd.f32 0.0, %v822
        %v824 = vpop.f32.mrb[0].mxu0
        %825 = vmatprep.mubr.f32.mxu0 0.0
        %826 = vmatmul.mubr.f32.gmra.mrb[0].mxu0 %v724
        %v827 = vpop.f32.mrb[0].mxu0
        %v828 = vadd.f32 0.0, %v827
        %v829 = vpop.f32.mrb[0].mxu0
        %830 = vdwg.mxu0
        %v831 = vadd.f32 %v648, %v793
        %v832 = vadd.f32 %v653, %v798
        %v833 = vadd.f32 %v658, %v803
        %v834 = vadd.f32 %v663, %v808
        %v835 = vadd.f32 %v668, %v813
        %v836 = vadd.f32 %v673, %v818
        %v837 = vadd.f32 %v678, %v823
        %v838 = vadd.f32 %v683, %v828
        %v840 = vsel %vm350, %v694, 0
        %v843 = vsel %vm350, %v695, 0
        %v846 = vsel %vm350, %v696, 0
        %v849 = vsel %vm350, %v697, 0
        %v852 = vsel %vm350, %v698, 0
        %v855 = vsel %vm350, %v699, 0
        %v858 = vsel %vm350, %v700, 0
        %v861 = vsel %vm350, %v701, 0
        %863 = vmatprep.subr.mxu0 0.0
        %864 = vmatpush1.msra.mxu0 %v407
        %865 = vmatprep.subr.mxu0 0.0
        %866 = vmatpush1.msra.mxu0 0.0
        %867 = vmatprep.subr.mxu0 0.0
        %868 = vmatpush1.msra.mxu0 0.0
        %869 = vmatprep.subr.mxu0 0.0
        %870 = vmatpush1.msra.mxu0 0.0
        %871 = vmatprep.subr.mxu0 0.0
        %872 = vmatpush1.msra.mxu0 0.0
        %873 = vmatprep.subr.mxu0 0.0
        %874 = vmatpush1.msra.mxu0 0.0
        %875 = vmatprep.subr.mxu0 0.0
        %876 = vmatpush1.msra.mxu0 0.0
        %877 = vmatprep.subr.mxu0 0.0
        %878 = vmatpush1.msra.mxu0 0.0
        %879 = vmatprep.subr.mxu0 0.0
        %880 = vmatpush1.msra.mxu0 0.0
        %881 = vmatprep.subr.mxu0 0.0
        %882 = vmatpush1.msra.mxu0 0.0
        %883 = vmatprep.subr.mxu0 0.0
        %884 = vmatpush1.msra.mxu0 0.0
        %885 = vmatprep.subr.mxu0 0.0
        %886 = vmatpush1.msra.mxu0 0.0
        %887 = vmatprep.subr.mxu0 0.0
        %888 = vmatpush1.msra.mxu0 0.0
        %889 = vmatprep.subr.mxu0 0.0
        %890 = vmatpush1.msra.mxu0 0.0
        %891 = vmatprep.subr.mxu0 0.0
        %892 = vmatpush1.msra.mxu0 0.0
        %893 = vmatprep.subr.mxu0 0.0
        %894 = vmatpush1.msra.mxu0 0.0
        %895 = vmatprep.subr.mxu0 0.0
        %896 = vmatpush1.msra.mxu0 0.0
        %897 = vmatprep.subr.mxu0 0.0
        %898 = vmatpush1.msra.mxu0 0.0
        %899 = vmatprep.subr.mxu0 0.0
        %900 = vmatpush1.msra.mxu0 0.0
        %901 = vmatprep.subr.mxu0 0.0
        %902 = vmatpush1.msra.mxu0 0.0
        %903 = vmatprep.subr.mxu0 0.0
        %904 = vmatpush1.msra.mxu0 0.0
        %905 = vmatprep.subr.mxu0 0.0
        %906 = vmatpush1.msra.mxu0 0.0
        %907 = vmatprep.subr.mxu0 0.0
        %908 = vmatpush1.msra.mxu0 0.0
        %909 = vmatprep.subr.mxu0 0.0
        %910 = vmatpush1.msra.mxu0 0.0
        %911 = vmatprep.subr.mxu0 0.0
        %912 = vmatpush1.msra.mxu0 0.0
        %913 = vmatprep.subr.mxu0 0.0
        %914 = vmatpush1.msra.mxu0 0.0
        %915 = vmatprep.subr.mxu0 0.0
        %916 = vmatpush1.msra.mxu0 0.0
        %917 = vmatprep.subr.mxu0 0.0
        %918 = vmatpush1.msra.mxu0 0.0
        %919 = vmatprep.subr.mxu0 0.0
        %920 = vmatpush1.msra.mxu0 0.0
        %921 = vmatprep.subr.mxu0 0.0
        %922 = vmatpush1.msra.mxu0 0.0
        %923 = vmatprep.subr.mxu0 0.0
        %924 = vmatpush1.msra.mxu0 0.0
        %925 = vmatprep.subr.mxu0 0.0
        %926 = vmatpush1.msra.mxu0 0.0
        %927 = vmatprep.mubr.f32.mxu0 0.0
        %928 = vmatmul.mubr.f32.gmra.mrb[0].mxu0 %v840
        %v929 = vpop.f32.mrb[0].mxu0
        %v930 = vadd.f32 0.0, %v929
        %v931 = vpop.f32.mrb[0].mxu0
        %932 = vmatprep.mubr.f32.mxu0 0.0
        %933 = vmatmul.mubr.f32.gmra.mrb[0].mxu0 %v843
        %v934 = vpop.f32.mrb[0].mxu0
        %v935 = vadd.f32 0.0, %v934
        %v936 = vpop.f32.mrb[0].mxu0
        %937 = vmatprep.mubr.f32.mxu0 0.0
        %938 = vmatmul.mubr.f32.gmra.mrb[0].mxu0 %v846
        %v939 = vpop.f32.mrb[0].mxu0
        %v940 = vadd.f32 0.0, %v939
        %v941 = vpop.f32.mrb[0].mxu0
        %942 = vmatprep.mubr.f32.mxu0 0.0
        %943 = vmatmul.mubr.f32.gmra.mrb[0].mxu0 %v849
        %v944 = vpop.f32.mrb[0].mxu0
        %v945 = vadd.f32 0.0, %v944
        %v946 = vpop.f32.mrb[0].mxu0
        %947 = vmatprep.mubr.f32.mxu0 0.0
        %948 = vmatmul.mubr.f32.gmra.mrb[0].mxu0 %v852
        %v949 = vpop.f32.mrb[0].mxu0
        %v950 = vadd.f32 0.0, %v949
        %v951 = vpop.f32.mrb[0].mxu0
        %952 = vmatprep.mubr.f32.mxu0 0.0
        %953 = vmatmul.mubr.f32.gmra.mrb[0].mxu0 %v855
        %v954 = vpop.f32.mrb[0].mxu0
        %v955 = vadd.f32 0.0, %v954
        %v956 = vpop.f32.mrb[0].mxu0
        %957 = vmatprep.mubr.f32.mxu0 0.0
        %958 = vmatmul.mubr.f32.gmra.mrb[0].mxu0 %v858
        %v959 = vpop.f32.mrb[0].mxu0
        %v960 = vadd.f32 0.0, %v959
        %v961 = vpop.f32.mrb[0].mxu0
        %962 = vmatprep.mubr.f32.mxu0 0.0
        %963 = vmatmul.mubr.f32.gmra.mrb[0].mxu0 %v861
        %v964 = vpop.f32.mrb[0].mxu0
        %v965 = vadd.f32 0.0, %v964
        %v966 = vpop.f32.mrb[0].mxu0
        %967 = vdwg.mxu0
        %v968 = vadd.f32 %v831, %v930
        %v969 = vadd.f32 %v832, %v935
        %v970 = vadd.f32 %v833, %v940
        %v971 = vadd.f32 %v834, %v945
        %v972 = vadd.f32 %v835, %v950
        %v973 = vadd.f32 %v836, %v955
        %v974 = vadd.f32 %v837, %v960
        %v975 = vadd.f32 %v838, %v965
        %v976 = vld [vmem:[%s397] sm:$0xff]
        %v977 = vld [vmem:[%s397 + $0x20] sm:$0xff]
        %v978 = vld [vmem:[%s397 + $0x40] sm:$0xff]
        %v979 = vld [vmem:[%s397 + $0x60] sm:$0xff]
        %v980 = vld [vmem:[%s397 + $0x80] sm:$0xff]
        %v981 = vld [vmem:[%s397 + $0xa0] sm:$0xff]
        %v982 = vld [vmem:[%s397 + $0xc0] sm:$0xff]
        %v983 = vld [vmem:[%s397 + $0xe0] sm:$0xff]
        %v984 = vld [vmem:[%s397 + $0x1] sm:$0xff]
        %v985 = vld [vmem:[%s397 + $0x21] sm:$0xff]
        %v986 = vld [vmem:[%s397 + $0x41] sm:$0xff]
        %v987 = vld [vmem:[%s397 + $0x61] sm:$0xff]
        %v988 = vld [vmem:[%s397 + $0x81] sm:$0xff]
        %v989 = vld [vmem:[%s397 + $0xa1] sm:$0xff]
        %v990 = vld [vmem:[%s397 + $0xc1] sm:$0xff]
        %v991 = vld [vmem:[%s397 + $0xe1] sm:$0xff]
        %v993 = vsel %vm350, %v976, 0
        %v996 = vsel %vm350, %v977, 0
        %v999 = vsel %vm350, %v978, 0
        %v1002 = vsel %vm350, %v979, 0
        %v1005 = vsel %vm350, %v980, 0
        %v1008 = vsel %vm350, %v981, 0
        %v1011 = vsel %vm350, %v982, 0
        %v1014 = vsel %vm350, %v983, 0
        %1016 = vmatprep.subr.mxu0 0.0
        %1017 = vmatpush1.msra.mxu0 %v411
        %1018 = vmatprep.subr.mxu0 0.0
        %1019 = vmatpush1.msra.mxu0 0.0
        %1020 = vmatprep.subr.mxu0 0.0
        %1021 = vmatpush1.msra.mxu0 0.0
        %1022 = vmatprep.subr.mxu0 0.0
        %1023 = vmatpush1.msra.mxu0 0.0
        %1024 = vmatprep.subr.mxu0 0.0
        %1025 = vmatpush1.msra.mxu0 0.0
        %1026 = vmatprep.subr.mxu0 0.0
        %1027 = vmatpush1.msra.mxu0 0.0
        %1028 = vmatprep.subr.mxu0 0.0
        %1029 = vmatpush1.msra.mxu0 0.0
        %1030 = vmatprep.subr.mxu0 0.0
        %1031 = vmatpush1.msra.mxu0 0.0
        %1032 = vmatprep.subr.mxu0 0.0
        %1033 = vmatpush1.msra.mxu0 0.0
        %1034 = vmatprep.subr.mxu0 0.0
        %1035 = vmatpush1.msra.mxu0 0.0
        %1036 = vmatprep.subr.mxu0 0.0
        %1037 = vmatpush1.msra.mxu0 0.0
        %1038 = vmatprep.subr.mxu0 0.0
        %1039 = vmatpush1.msra.mxu0 0.0
        %1040 = vmatprep.subr.mxu0 0.0
        %1041 = vmatpush1.msra.mxu0 0.0
        %1042 = vmatprep.subr.mxu0 0.0
        %1043 = vmatpush1.msra.mxu0 0.0
        %1044 = vmatprep.subr.mxu0 0.0
        %1045 = vmatpush1.msra.mxu0 0.0
        %1046 = vmatprep.subr.mxu0 0.0
        %1047 = vmatpush1.msra.mxu0 0.0
        %1048 = vmatprep.subr.mxu0 0.0
        %1049 = vmatpush1.msra.mxu0 0.0
        %1050 = vmatprep.subr.mxu0 0.0
        %1051 = vmatpush1.msra.mxu0 0.0
        %1052 = vmatprep.subr.mxu0 0.0
        %1053 = vmatpush1.msra.mxu0 0.0
        %1054 = vmatprep.subr.mxu0 0.0
        %1055 = vmatpush1.msra.mxu0 0.0
        %1056 = vmatprep.subr.mxu0 0.0
        %1057 = vmatpush1.msra.mxu0 0.0
        %1058 = vmatprep.subr.mxu0 0.0
        %1059 = vmatpush1.msra.mxu0 0.0
        %1060 = vmatprep.subr.mxu0 0.0
        %1061 = vmatpush1.msra.mxu0 0.0
        %1062 = vmatprep.subr.mxu0 0.0
        %1063 = vmatpush1.msra.mxu0 0.0
        %1064 = vmatprep.subr.mxu0 0.0
        %1065 = vmatpush1.msra.mxu0 0.0
        %1066 = vmatprep.subr.mxu0 0.0
        %1067 = vmatpush1.msra.mxu0 0.0
        %1068 = vmatprep.subr.mxu0 0.0
        %1069 = vmatpush1.msra.mxu0 0.0
        %1070 = vmatprep.subr.mxu0 0.0
        %1071 = vmatpush1.msra.mxu0 0.0
        %1072 = vmatprep.subr.mxu0 0.0
        %1073 = vmatpush1.msra.mxu0 0.0
        %1074 = vmatprep.subr.mxu0 0.0
        %1075 = vmatpush1.msra.mxu0 0.0
        %1076 = vmatprep.subr.mxu0 0.0
        %1077 = vmatpush1.msra.mxu0 0.0
        %1078 = vmatprep.subr.mxu0 0.0
        %1079 = vmatpush1.msra.mxu0 0.0
        %1080 = vmatprep.mubr.f32.mxu0 0.0
        %1081 = vmatmul.mubr.f32.gmra.mrb[0].mxu0 %v993
        %v1082 = vpop.f32.mrb[0].mxu0
        %v1083 = vadd.f32 0.0, %v1082
        %v1084 = vpop.f32.mrb[0].mxu0
        %1085 = vmatprep.mubr.f32.mxu0 0.0
        %1086 = vmatmul.mubr.f32.gmra.mrb[0].mxu0 %v996
        %v1087 = vpop.f32.mrb[0].mxu0
        %v1088 = vadd.f32 0.0, %v1087
        %v1089 = vpop.f32.mrb[0].mxu0
        %1090 = vmatprep.mubr.f32.mxu0 0.0
        %1091 = vmatmul.mubr.f32.gmra.mrb[0].mxu0 %v999
        %v1092 = vpop.f32.mrb[0].mxu0
        %v1093 = vadd.f32 0.0, %v1092
        %v1094 = vpop.f32.mrb[0].mxu0
        %1095 = vmatprep.mubr.f32.mxu0 0.0
        %1096 = vmatmul.mubr.f32.gmra.mrb[0].mxu0 %v1002
        %v1097 = vpop.f32.mrb[0].mxu0
        %v1098 = vadd.f32 0.0, %v1097
        %v1099 = vpop.f32.mrb[0].mxu0
        %1100 = vmatprep.mubr.f32.mxu0 0.0
        %1101 = vmatmul.mubr.f32.gmra.mrb[0].mxu0 %v1005
        %v1102 = vpop.f32.mrb[0].mxu0
        %v1103 = vadd.f32 0.0, %v1102
        %v1104 = vpop.f32.mrb[0].mxu0
        %1105 = vmatprep.mubr.f32.mxu0 0.0
        %1106 = vmatmul.mubr.f32.gmra.mrb[0].mxu0 %v1008
        %v1107 = vpop.f32.mrb[0].mxu0
        %v1108 = vadd.f32 0.0, %v1107
        %v1109 = vpop.f32.mrb[0].mxu0
        %1110 = vmatprep.mubr.f32.mxu0 0.0
        %1111 = vmatmul.mubr.f32.gmra.mrb[0].mxu0 %v1011
        %v1112 = vpop.f32.mrb[0].mxu0
        %v1113 = vadd.f32 0.0, %v1112
        %v1114 = vpop.f32.mrb[0].mxu0
        %1115 = vmatprep.mubr.f32.mxu0 0.0
        %1116 = vmatmul.mubr.f32.gmra.mrb[0].mxu0 %v1014
        %v1117 = vpop.f32.mrb[0].mxu0
        %v1118 = vadd.f32 0.0, %v1117
        %v1119 = vpop.f32.mrb[0].mxu0
        %1120 = vdwg.mxu0
        %v1121 = vadd.f32 %v968, %v1083
        %v1122 = vadd.f32 %v969, %v1088
        %v1123 = vadd.f32 %v970, %v1093
        %v1124 = vadd.f32 %v971, %v1098
        %v1125 = vadd.f32 %v972, %v1103
        %v1126 = vadd.f32 %v973, %v1108
        %v1127 = vadd.f32 %v974, %v1113
        %v1128 = vadd.f32 %v975, %v1118
        %v1130 = vsel %vm350, %v984, 0
        %v1133 = vsel %vm350, %v985, 0
        %v1136 = vsel %vm350, %v986, 0
        %v1139 = vsel %vm350, %v987, 0
        %v1142 = vsel %vm350, %v988, 0
        %v1145 = vsel %vm350, %v989, 0
        %v1148 = vsel %vm350, %v990, 0
        %v1151 = vsel %vm350, %v991, 0
        %1153 = vmatprep.subr.mxu0 0.0
        %1154 = vmatpush1.msra.mxu0 %v408
        %1155 = vmatprep.subr.mxu0 0.0
        %1156 = vmatpush1.msra.mxu0 0.0
        %1157 = vmatprep.subr.mxu0 0.0
        %1158 = vmatpush1.msra.mxu0 0.0
        %1159 = vmatprep.subr.mxu0 0.0
        %1160 = vmatpush1.msra.mxu0 0.0
        %1161 = vmatprep.subr.mxu0 0.0
        %1162 = vmatpush1.msra.mxu0 0.0
        %1163 = vmatprep.subr.mxu0 0.0
        %1164 = vmatpush1.msra.mxu0 0.0
        %1165 = vmatprep.subr.mxu0 0.0
        %1166 = vmatpush1.msra.mxu0 0.0
        %1167 = vmatprep.subr.mxu0 0.0
        %1168 = vmatpush1.msra.mxu0 0.0
        %1169 = vmatprep.subr.mxu0 0.0
        %1170 = vmatpush1.msra.mxu0 0.0
        %1171 = vmatprep.subr.mxu0 0.0
        %1172 = vmatpush1.msra.mxu0 0.0
        %1173 = vmatprep.subr.mxu0 0.0
        %1174 = vmatpush1.msra.mxu0 0.0
        %1175 = vmatprep.subr.mxu0 0.0
        %1176 = vmatpush1.msra.mxu0 0.0
        %1177 = vmatprep.subr.mxu0 0.0
        %1178 = vmatpush1.msra.mxu0 0.0
        %1179 = vmatprep.subr.mxu0 0.0
        %1180 = vmatpush1.msra.mxu0 0.0
        %1181 = vmatprep.subr.mxu0 0.0
        %1182 = vmatpush1.msra.mxu0 0.0
        %1183 = vmatprep.subr.mxu0 0.0
        %1184 = vmatpush1.msra.mxu0 0.0
        %1185 = vmatprep.subr.mxu0 0.0
        %1186 = vmatpush1.msra.mxu0 0.0
        %1187 = vmatprep.subr.mxu0 0.0
        %1188 = vmatpush1.msra.mxu0 0.0
        %1189 = vmatprep.subr.mxu0 0.0
        %1190 = vmatpush1.msra.mxu0 0.0
        %1191 = vmatprep.subr.mxu0 0.0
        %1192 = vmatpush1.msra.mxu0 0.0
        %1193 = vmatprep.subr.mxu0 0.0
        %1194 = vmatpush1.msra.mxu0 0.0
        %1195 = vmatprep.subr.mxu0 0.0
        %1196 = vmatpush1.msra.mxu0 0.0
        %1197 = vmatprep.subr.mxu0 0.0
        %1198 = vmatpush1.msra.mxu0 0.0
        %1199 = vmatprep.subr.mxu0 0.0
        %1200 = vmatpush1.msra.mxu0 0.0
        %1201 = vmatprep.subr.mxu0 0.0
        %1202 = vmatpush1.msra.mxu0 0.0
        %1203 = vmatprep.subr.mxu0 0.0
        %1204 = vmatpush1.msra.mxu0 0.0
        %1205 = vmatprep.subr.mxu0 0.0
        %1206 = vmatpush1.msra.mxu0 0.0
        %1207 = vmatprep.subr.mxu0 0.0
        %1208 = vmatpush1.msra.mxu0 0.0
        %1209 = vmatprep.subr.mxu0 0.0
        %1210 = vmatpush1.msra.mxu0 0.0
        %1211 = vmatprep.subr.mxu0 0.0
        %1212 = vmatpush1.msra.mxu0 0.0
        %1213 = vmatprep.subr.mxu0 0.0
        %1214 = vmatpush1.msra.mxu0 0.0
        %1215 = vmatprep.subr.mxu0 0.0
        %1216 = vmatpush1.msra.mxu0 0.0
        %1217 = vmatprep.mubr.f32.mxu0 0.0
        %1218 = vmatmul.mubr.f32.gmra.mrb[0].mxu0 %v1130
        %v1219 = vpop.f32.mrb[0].mxu0
        %v1220 = vadd.f32 0.0, %v1219
        %v1221 = vpop.f32.mrb[0].mxu0
        %1222 = vmatprep.mubr.f32.mxu0 0.0
        %1223 = vmatmul.mubr.f32.gmra.mrb[0].mxu0 %v1133
        %v1224 = vpop.f32.mrb[0].mxu0
        %v1225 = vadd.f32 0.0, %v1224
        %v1226 = vpop.f32.mrb[0].mxu0
        %1227 = vmatprep.mubr.f32.mxu0 0.0
        %1228 = vmatmul.mubr.f32.gmra.mrb[0].mxu0 %v1136
        %v1229 = vpop.f32.mrb[0].mxu0
        %v1230 = vadd.f32 0.0, %v1229
        %v1231 = vpop.f32.mrb[0].mxu0
        %1232 = vmatprep.mubr.f32.mxu0 0.0
        %1233 = vmatmul.mubr.f32.gmra.mrb[0].mxu0 %v1139
        %v1234 = vpop.f32.mrb[0].mxu0
        %v1235 = vadd.f32 0.0, %v1234
        %v1236 = vpop.f32.mrb[0].mxu0
        %1237 = vmatprep.mubr.f32.mxu0 0.0
        %1238 = vmatmul.mubr.f32.gmra.mrb[0].mxu0 %v1142
        %v1239 = vpop.f32.mrb[0].mxu0
        %v1240 = vadd.f32 0.0, %v1239
        %v1241 = vpop.f32.mrb[0].mxu0
        %1242 = vmatprep.mubr.f32.mxu0 0.0
        %1243 = vmatmul.mubr.f32.gmra.mrb[0].mxu0 %v1145
        %v1244 = vpop.f32.mrb[0].mxu0
        %v1245 = vadd.f32 0.0, %v1244
        %v1246 = vpop.f32.mrb[0].mxu0
        %1247 = vmatprep.mubr.f32.mxu0 0.0
        %1248 = vmatmul.mubr.f32.gmra.mrb[0].mxu0 %v1148
        %v1249 = vpop.f32.mrb[0].mxu0
        %v1250 = vadd.f32 0.0, %v1249
        %v1251 = vpop.f32.mrb[0].mxu0
        %1252 = vmatprep.mubr.f32.mxu0 0.0
        %1253 = vmatmul.mubr.f32.gmra.mrb[0].mxu0 %v1151
        %v1254 = vpop.f32.mrb[0].mxu0
        %v1255 = vadd.f32 0.0, %v1254
        %v1256 = vpop.f32.mrb[0].mxu0
        %1257 = vdwg.mxu0
        %v1258 = vadd.f32 %v1121, %v1220
        %v1259 = vadd.f32 %v1122, %v1225
        %v1260 = vadd.f32 %v1123, %v1230
        %v1261 = vadd.f32 %v1124, %v1235
        %v1262 = vadd.f32 %v1125, %v1240
        %v1263 = vadd.f32 %v1126, %v1245
        %v1264 = vadd.f32 %v1127, %v1250
        %v1265 = vadd.f32 %v1128, %v1255
        %1266 = vst.msk [vmem:[%s245] sm:$0xff] %vm350, %v1258
        %1267 = vst.msk [vmem:[%s245 + $0x8] sm:$0xff] %vm350, %v1259
        %1268 = vst.msk [vmem:[%s245 + $0x10] sm:$0xff] %vm350, %v1260
        %1269 = vst.msk [vmem:[%s245 + $0x18] sm:$0xff] %vm350, %v1261
        %1270 = vst.msk [vmem:[%s245 + $0x20] sm:$0xff] %vm350, %v1262
        %1271 = vst.msk [vmem:[%s245 + $0x28] sm:$0xff] %vm350, %v1263
        %1272 = vst.msk [vmem:[%s245 + $0x30] sm:$0xff] %vm350, %v1264
        %1273 = vst.msk [vmem:[%s245 + $0x38] sm:$0xff] %vm350, %v1265
        %s1274 = sand.u32 %s139, 1
        %s1275 = scalar_lea.sflag [#allocation4], %s1274
        %s1276 = sand.u32 %s139, 1
        %s1277 = smul.addr %s1276, 64
        %s1278 = scalar_lea.vmem [#allocation3], %s1277
        %p1279 = scmp.lt.s32.totalorder %s21, 1
        %s1280 = scalar_select %p1279, %s21, 1
        %s1281 = smul.addr %s1280, 8
        %s1282 = smul.addr %s1281, 8
        %s1283 = scalar_lea.vmem %s6, %s1282
        // Predicated region
        $region41: #{tpu_custom_call.1} parent=39 // pred_check
          %p1284 = pneg %p149
        $region42: #{tpu_custom_call.1} parent=39 // pred_check_branch
          %1286 = sbr.rel (%p1284) target = $region44
        $region43: #{tpu_custom_call.1} parent=39 // pred_region
          %s1288 = ssub.s32 1024, 1024
          %1289 = vsyncadd %s1275, %s1288
          %s1290 = smul.addr %s21, 8
          %s1291 = smul.addr %s1290, 128
          %s1292 = scalar_lea.hbm %s5, %s1291
          %s1293 = sshll.u32 %s1278, 4
          %s1294 = int_to_ptr.vmem [resolvable:$true] %s1293
          %1299 = dma.vmem_to_hbm [thread:$0]  %s1294, 1024, %s1292, %s1275, 128, 128, 8
        $region44: #{tpu_custom_call.1} parent=39 // pred_fallthru
          _
        // Predicated region
        $region45: #{tpu_custom_call.1} parent=39 // pred_check
          %p1300 = pneg %p175
        $region46: #{tpu_custom_call.1} parent=39 // pred_check_branch
          %1302 = sbr.rel (%p1300) target = $region48
        $region47: #{tpu_custom_call.1} parent=39 // pred_region
          _
        $region48: #{tpu_custom_call.1} parent=39 // pred_fallthru
          _
      $region40: #{tpu_custom_call.1} parent=5 // pred_fallthru
        _
      %p1303 = scmp.le.s32.totalorder 2, %s16
      // Predicated region
      $region49: #{tpu_custom_call.1} parent=5 // pred_check
        %p1304 = pneg %p1303
      $region50: #{tpu_custom_call.1} parent=5 // pred_check_branch
        %1306 = sbr.rel (%p1304) target = $region52
      $region51: #{tpu_custom_call.1} parent=5 // pred_region
        %s1307 = ssub.s32 %s16, 2
        // Predicated region
        $region53: #{tpu_custom_call.1} parent=51 // pred_check
          %p1308 = pneg %p155
        $region54: #{tpu_custom_call.1} parent=51 // pred_check_branch
          %1310 = sbr.rel (%p1308) target = $region56
        $region55: #{tpu_custom_call.1} parent=51 // pred_region
          %s1311 = sand.u32 %s140, 1
          %s1312 = scalar_lea.sflag [#allocation4], %s1311
          %s1313 = sand.u32 %s140, 1
          %s1314 = smul.addr %s1313, 64
          %s1315 = scalar_lea.vmem [#allocation3], %s1314
          %1316 = dma.done %s1312, 1024
        $region56: #{tpu_custom_call.1} parent=51 // pred_fallthru
          _
        // Predicated region
        $region57: #{tpu_custom_call.1} parent=51 // pred_check
          %p1317 = pneg %p181
        $region58: #{tpu_custom_call.1} parent=51 // pred_check_branch
          %1319 = sbr.rel (%p1317) target = $region60
        $region59: #{tpu_custom_call.1} parent=51 // pred_region
          %p1320 = scmp.lt.s32.totalorder %s22, 1
          %s1321 = scalar_select %p1320, %s22, 1
          %s1322 = smul.addr %s1321, 8
          %s1323 = smul.addr %s1322, 8
          %s1324 = scalar_lea.vmem %s6, %s1323
        $region60: #{tpu_custom_call.1} parent=51 // pred_fallthru
          _
      $region52: #{tpu_custom_call.1} parent=5 // pred_fallthru
        _
    $region6: #{tpu_custom_call.1} parent=1 // loop_footer
      %s20 = sadd.s32 1, %s16
    $region7: #{tpu_custom_call.1} parent=1 // loop_footer_branch
      %15 = sbr.rel target = $region3
    $region8: #{tpu_custom_call.1} parent=1 // loop_exit
      _
    %1325 = vsyncpa [#allocation4], 1
    %s1326 = scalar_lea.sflag [#allocation4], 1
    %1327 = vsyncpa %s1326, 1

</llo_original>
